<compile_context>
chip_gen: v7x
topology: tpu7x:2x2x1
jax: 0.10.0
libtpu: 0.0.40
codegen_flags: <defaults>
</compile_context>

<pallas_src>
import functools
from typing import NamedTuple

import jax
import jax.numpy as jnp
import numpy as np
from jax.experimental import pallas as pl
from jax.experimental.pallas import tpu as pltpu

_LANE = 128
_SUBLANE = 8


def _round_up(v, m):
    return (v + m - 1) // m * m


class MoEGateWeights(NamedTuple):
    wg: jax.Array      # (D, E_pad)   f32 gate weight, zero-padded lanes
    we: jax.Array      # (D, EO_pad)  mxu_dtype packed expert stack, zero-padded
    mmap: jax.Array    # (E_pad, EO_pad) f32 0/1 expert -> column expansion map
    smap: jax.Array    # (EO_pad, O_pad) f32 0/1 column -> output block-sum map
    input_size: int
    num_experts: int
    expert_out: int


def prepare_moe_gate_weights(wg_t, we_stack, *, mxu_dtype=jnp.bfloat16):
    """One-time host-side weight repack (weights are static at inference).

    wg_t: (D, E) transposed nn.Linear gating weight.
    we_stack: (E, D, O) stacked bias-free expert weights.
    """
    D, E = wg_t.shape
    O = we_stack.shape[-1]
    E_pad = _round_up(E, _LANE)
    EO = E * O
    EO_pad = _round_up(EO, _LANE)
    O_pad = _round_up(O, _LANE)

    wg_pad = jnp.pad(wg_t.astype(jnp.float32), ((0, 0), (0, E_pad - E)))
    # Pack experts contiguously (no per-expert lane padding); pad only EO total.
    we_flat = jnp.transpose(we_stack, (1, 0, 2)).reshape(D, EO)
    we_flat = jnp.pad(we_flat, ((0, 0), (0, EO_pad - EO))).astype(mxu_dtype)

    # Constant 0/1 maps for the MXU-based weighted combine (exact: the nonzero
    # entries are 1.0, so the f32 map matmuls introduce no rounding).
    c = np.arange(EO)
    mmap = np.zeros((E_pad, EO_pad), np.float32)
    mmap[c // O, c] = 1.0                      # expert e -> its O columns
    smap = np.zeros((EO_pad, O_pad), np.float32)
    smap[c, c % O] = 1.0                       # column c -> output slot c % O

    return MoEGateWeights(wg_pad, we_flat, jnp.asarray(mmap), jnp.asarray(smap),
                          D, E, O)


def _moe_gate_kernel(x_ref, wg_ref, we_ref, mmap_ref, smap_ref,
                     out_ref, ew_ref, *, num_experts, num_nonzeros):
    x = x_ref[...]                                                   # (TB, D) f32

    # Gate logits: small f32 matmul, decoupled from the expert slab so the
    # top-k/softmax can run while the big matmul result drains.
    logits = jnp.dot(x, wg_ref[...],
                     preferred_element_type=jnp.float32)             # (TB, E_pad)
    tb, e_pad = logits.shape
    NEG = jnp.float32(-1e30)
    col = jax.lax.broadcasted_iota(jnp.int32, (tb, e_pad), 1)
    logits = jnp.where(col < num_experts, logits, NEG)               # mask pad cols

    # Packed expert matmul: bf16 (default) operands, f32 accumulation.
    rep = jnp.dot(x.astype(we_ref.dtype), we_ref[...],
                  preferred_element_type=jnp.float32)                # (TB, EO_pad)

    # --- top-k selection mask (iterative argmax, leftmost on ties) ---
    masked = logits
    selected = jnp.zeros((tb, e_pad), jnp.bool_)
    for _ in range(num_nonzeros):
        m = jnp.max(masked, axis=-1, keepdims=True)
        is_max = masked == m
        idx = jnp.min(jnp.where(is_max, col, e_pad), axis=-1, keepdims=True)
        sel = col == idx
        selected = jnp.logical_or(selected, sel)
        masked = jnp.where(sel, NEG, masked)

    # --- softmax over the selected logits (f32 vector math, zeros elsewhere) ---
    gl = jnp.where(selected, logits, NEG)
    gl = gl - jnp.max(gl, axis=-1, keepdims=True)
    p = jnp.where(selected, jnp.exp(gl), 0.0)
    inv = pl.reciprocal(jnp.sum(p, axis=-1, keepdims=True), approx=True)  # EUP slot
    w = p * inv                                                      # (TB, E_pad)
    ew_ref[...] = w[:, :num_experts].astype(ew_ref.dtype)            # (TB, E) store

    # --- weighted combine entirely on MXU/VPU (no per-expert lane broadcasts) ---
    w_cols = jnp.dot(w, mmap_ref[...],
                     preferred_element_type=jnp.float32)             # (TB, EO_pad)
    weighted = rep * w_cols                                          # VPU, f32
    out = jnp.dot(weighted, smap_ref[...],
                  preferred_element_type=jnp.float32)                # (TB, O_pad)
    out_ref[...] = out.astype(out_ref.dtype)                         # lane-dense


def moe_gate_forward(x, weights: MoEGateWeights, *, num_nonzeros, block_b=256):
    """x: (B, D) float32.  Returns (output (B, O), expert_weights (B, E))."""
    B, D = x.shape
    assert D == weights.input_size
    E, O = weights.num_experts, weights.expert_out
    E_pad = weights.wg.shape[1]
    EO_pad = weights.we.shape[1]
    O_pad = weights.smap.shape[1]
    we_bytes = jnp.dtype(weights.we.dtype).itemsize

    # Batch tile: >= 2 grid steps whenever B allows (megacore sharding on v7x),
    # 256-row default (v6e-sized), always a multiple of 8 sublanes.
    TB = max(_SUBLANE, min(block_b, _round_up(-(-B // 2), _SUBLANE)))
    B_pad = _round_up(B, TB)
    # x stays f32 so gate logits / top-k ranking are exact; the expert matmul
    # casts it to the bf16 weight dtype inside the kernel.
    x_pad = jnp.pad(x.astype(jnp.float32), ((0, B_pad - B), (0, 0)))

    kernel = functools.partial(_moe_gate_kernel, num_experts=E,
                               num_nonzeros=num_nonzeros)
    out_shape = (jax.ShapeDtypeStruct((B_pad, O_pad), jnp.float32),
                 jax.ShapeDtypeStruct((B_pad, E), jnp.float32))

    def run(weight_pipeline_mode, weight_bufs):
        def wspec(shape):
            kw = {} if weight_pipeline_mode is None else dict(
                pipeline_mode=weight_pipeline_mode)
            return pl.BlockSpec(shape, lambda b: (0, 0), **kw)

        # VMEM budget: actual operand widths, single/double-buffered constant
        # weights, the f32 combine intermediates, 2x headroom; capped at 3/4 of
        # the queried physical VMEM (64 MiB on v7x, 128 MiB on v5e/v6e).
        vmem_est = (
            2 * TB * D * 4                                    # x tiles (dbl buf)
            + weight_bufs * (D * E_pad * 4 + D * EO_pad * we_bytes
                             + E_pad * EO_pad * 4 + EO_pad * O_pad * 4)
            + 2 * (TB * O_pad * 4 + TB * E * 4)               # output tiles
            + 3 * TB * EO_pad * 4                             # rep/w_cols/weighted
            + 4 * TB * E_pad * 4)                             # logits / top-k temps
        try:
            phys = pltpu.get_tpu_info().vmem_capacity_bytes
        except Exception:
            phys = 64 << 20
        vmem_bytes = int(min(max(2 * vmem_est, 16 << 20), phys * 3 // 4))

        return pl.pallas_call(
            kernel,
            out_shape=out_shape,
            grid_spec=pltpu.PrefetchScalarGridSpec(
                num_scalar_prefetch=0,
                grid=(B_pad // TB,),
                in_specs=[
                    pl.BlockSpec((TB, D), lambda b: (b, 0)),
                    wspec((D, E_pad)),         # gate weight   (grid-invariant)
                    wspec((D, EO_pad)),        # expert slab   (grid-invariant)
                    wspec((E_pad, EO_pad)),    # expansion map (grid-invariant)
                    wspec((EO_pad, O_pad)),    # block-sum map (grid-invariant)
                ],
                out_specs=[
                    pl.BlockSpec((TB, O_pad), lambda b: (b, 0)),
                    pl.BlockSpec((TB, E), lambda b: (b, 0)),
                ],
            ),
            compiler_params=pltpu.CompilerParams(
                dimension_semantics=("parallel",),   # shards batch tiles on v7x
                vmem_limit_bytes=vmem_bytes),
        )(x_pad, weights.wg, weights.we, weights.mmap, weights.smap)

    try:
        # Grid-invariant weights: single buffering halves their VMEM footprint.
        out_pad, ew_pad = run(pl.Buffered(1), 1)
    except Exception:
        out_pad, ew_pad = run(None, 2)   # fallback if pipeline_mode unsupported

    return out_pad[:B, :O], ew_pad[:B]


def _reference(x, wg_t, we_stack, num_nonzeros):
    """Pure-JAX reference mirroring PyTorch eval semantics."""
    logits = x @ wg_t                                                # (B, E)
    vals, idx = jax.lax.top_k(logits, num_nonzeros)
    soft = jax.nn.softmax(vals, axis=1)
    ew = jnp.zeros_like(logits)
    ew = jax.vmap(lambda row, i, s: row.at[i].set(s))(ew, idx, soft)
    rep = jnp.einsum('bd,edo->ebo', x, we_stack)                     # (E, B, O)
    out = jnp.einsum('ij,ji...->i...', ew, rep)
    return out, ew


if __name__ == "__main__":
    B, D, E, O, K = 8, 32, 8, 32, 2   # batch, input_size, num_experts, expert_out, k

    key = jax.random.PRNGKey(0)
    kx, kg, ke = jax.random.split(key, 3)

    x = jax.random.normal(kx, (B, D), dtype=jnp.float32)
    # nn.Linear(input_size, num_experts, bias=False) -> weight (E, D).
    bound = 1.0 / np.sqrt(D)
    wg = jax.random.uniform(kg, (E, D), jnp.float32, -bound, bound)
    # experts_shared: E bias-free linears (input_size -> O), stacked as (E, D, O).
    we_stack = jax.random.uniform(ke, (E, D, O), jnp.float32, -bound, bound)

    # Host-side weight repack runs ONCE (hoisted out of the per-call path).
    weights = prepare_moe_gate_weights(wg.T, we_stack)

    out, ew = moe_gate_forward(x, weights, num_nonzeros=K)
    jax.block_until_ready((out, ew))

    ref_out, ref_ew = _reference(x, wg.T, we_stack, K)
    # ew: f32 logits + approximate (EUP) reciprocal in the softmax.
    assert np.allclose(np.asarray(ew), np.asarray(ref_ew), atol=5e-3, rtol=5e-3)
    # out: bf16 expert-matmul operands (f32 accumulation) vs. f32 reference.
    assert np.allclose(np.asarray(out), np.asarray(ref_out), atol=1e-2, rtol=1e-2)

    print("KERNEL_OK")
</pallas_src>

<mosaic_0001>
module attributes {stable_mosaic.version = 11 : i64} {
  func.func @_moe_gate_kernel(%arg0: i32, %arg1: memref<8x32xf32, #tpu.memory_space<vmem>>, %arg2: memref<32x128xf32, #tpu.memory_space<vmem>>, %arg3: memref<32x256xbf16, #tpu.memory_space<vmem>>, %arg4: memref<128x256xf32, #tpu.memory_space<vmem>>, %arg5: memref<256x128xf32, #tpu.memory_space<vmem>>, %arg6: memref<8x128xf32, #tpu.memory_space<vmem>>, %arg7: memref<8x8xf32, #tpu.memory_space<vmem>>) attributes {dimension_semantics = [#tpu.dimension_semantics<parallel>], iteration_bounds = array<i64: 1>, scalar_prefetch = 0 : i64, scratch_operands = 0 : i64, tpu.core_type = #tpu.core_type<tc>, window_params = [{transform_indices = @transform_0, window_bounds = array<i64: 8, 32>}, {pipeline_mode = #tpu.pipeline_mode<synchronous>, transform_indices = @transform_1, window_bounds = array<i64: 32, 128>}, {pipeline_mode = #tpu.pipeline_mode<synchronous>, transform_indices = @transform_2, window_bounds = array<i64: 32, 256>}, {pipeline_mode = #tpu.pipeline_mode<synchronous>, transform_indices = @transform_3, window_bounds = array<i64: 128, 256>}, {pipeline_mode = #tpu.pipeline_mode<synchronous>, transform_indices = @transform_4, window_bounds = array<i64: 256, 128>}, {transform_indices = @transform_5, window_bounds = array<i64: 8, 128>}, {transform_indices = @transform_6, window_bounds = array<i64: 8, 8>}]} {
    %c0 = arith.constant 0 : index
    %c0_0 = arith.constant 0 : index
    %0 = vector.load %arg1[%c0, %c0_0] : memref<8x32xf32, #tpu.memory_space<vmem>>, vector<8x32xf32>
    %c0_1 = arith.constant 0 : index
    %c0_2 = arith.constant 0 : index
    %1 = vector.load %arg2[%c0_1, %c0_2] : memref<32x128xf32, #tpu.memory_space<vmem>>, vector<32x128xf32>
    %cst = arith.constant dense<0.000000e+00> : vector<8x128xf32>
    %2 = tpu.matmul %0, %1, %cst {dimension_numbers = #tpu.dot_dimension_numbers<[1], [0], [0], [1], [0, 0, 1, 1], [], []>} : vector<8x32xf32>, vector<32x128xf32>, vector<8x128xf32> -> vector<8x128xf32>
    %3 = tpu.iota {dimensions = array<i32: 1>} : vector<8x128xi32>
    %c8_i32 = arith.constant 8 : i32
    %4 = vector.broadcast %c8_i32 : i32 to vector<8x128xi32>
    %5 = arith.cmpi slt, %3, %4 : vector<8x128xi32>
    %cst_3 = arith.constant -1.000000e+30 : f32
    %6 = vector.broadcast %cst_3 : f32 to vector<8x128xf32>
    %7 = arith.select %5, %2, %6 : vector<8x128xi1>, vector<8x128xf32>
    %8 = arith.truncf %0 : vector<8x32xf32> to vector<8x32xbf16>
    %c0_4 = arith.constant 0 : index
    %c0_5 = arith.constant 0 : index
    %9 = vector.load %arg3[%c0_4, %c0_5] : memref<32x256xbf16, #tpu.memory_space<vmem>>, vector<32x256xbf16>
    %cst_6 = arith.constant dense<0.000000e+00> : vector<8x256xf32>
    %10 = tpu.matmul %8, %9, %cst_6 {dimension_numbers = #tpu.dot_dimension_numbers<[1], [0], [0], [1], [0, 0, 1, 1], [], []>} : vector<8x32xbf16>, vector<32x256xbf16>, vector<8x256xf32> -> vector<8x256xf32>
    %false = arith.constant false
    %11 = vector.broadcast %false : i1 to vector<8x128xi1>
    %cst_7 = arith.constant dense<0xFF800000> : vector<8xf32>
    %12 = vector.multi_reduction <maximumf>, %7, %cst_7 [1] : vector<8x128xf32> to vector<8xf32>
    %13 = vector.shape_cast %12 : vector<8xf32> to vector<8x1xf32>
    %14 = vector.broadcast %13 : vector<8x1xf32> to vector<8x128xf32>
    %15 = arith.cmpf oeq, %7, %14 : vector<8x128xf32>
    %c128_i32 = arith.constant 128 : i32
    %16 = vector.broadcast %c128_i32 : i32 to vector<8x128xi32>
    %17 = arith.select %15, %3, %16 : vector<8x128xi1>, vector<8x128xi32>
    %cst_8 = arith.constant dense<2147483647> : vector<8xi32>
    %18 = vector.multi_reduction <minsi>, %17, %cst_8 [1] : vector<8x128xi32> to vector<8xi32>
    %19 = vector.shape_cast %18 : vector<8xi32> to vector<8x1xi32>
    %20 = vector.broadcast %19 : vector<8x1xi32> to vector<8x128xi32>
    %21 = arith.cmpi eq, %3, %20 : vector<8x128xi32>
    %22 = arith.ori %11, %21 : vector<8x128xi1>
    %cst_9 = arith.constant -1.000000e+30 : f32
    %23 = vector.broadcast %cst_9 : f32 to vector<8x128xf32>
    %24 = arith.select %21, %23, %7 : vector<8x128xi1>, vector<8x128xf32>
    %cst_10 = arith.constant dense<0xFF800000> : vector<8xf32>
    %25 = vector.multi_reduction <maximumf>, %24, %cst_10 [1] : vector<8x128xf32> to vector<8xf32>
    %26 = vector.shape_cast %25 : vector<8xf32> to vector<8x1xf32>
    %27 = vector.broadcast %26 : vector<8x1xf32> to vector<8x128xf32>
    %28 = arith.cmpf oeq, %24, %27 : vector<8x128xf32>
    %c128_i32_11 = arith.constant 128 : i32
    %29 = vector.broadcast %c128_i32_11 : i32 to vector<8x128xi32>
    %30 = arith.select %28, %3, %29 : vector<8x128xi1>, vector<8x128xi32>
    %cst_12 = arith.constant dense<2147483647> : vector<8xi32>
    %31 = vector.multi_reduction <minsi>, %30, %cst_12 [1] : vector<8x128xi32> to vector<8xi32>
    %32 = vector.shape_cast %31 : vector<8xi32> to vector<8x1xi32>
    %33 = vector.broadcast %32 : vector<8x1xi32> to vector<8x128xi32>
    %34 = arith.cmpi eq, %3, %33 : vector<8x128xi32>
    %35 = arith.ori %22, %34 : vector<8x128xi1>
    %cst_13 = arith.constant -1.000000e+30 : f32
    %36 = vector.broadcast %cst_13 : f32 to vector<8x128xf32>
    %37 = arith.select %35, %7, %36 : vector<8x128xi1>, vector<8x128xf32>
    %cst_14 = arith.constant dense<0xFF800000> : vector<8xf32>
    %38 = vector.multi_reduction <maximumf>, %37, %cst_14 [1] : vector<8x128xf32> to vector<8xf32>
    %39 = vector.shape_cast %38 : vector<8xf32> to vector<8x1xf32>
    %40 = vector.broadcast %39 : vector<8x1xf32> to vector<8x128xf32>
    %41 = arith.subf %37, %40 : vector<8x128xf32>
    %42 = math.exp %41 : vector<8x128xf32>
    %cst_15 = arith.constant 0.000000e+00 : f32
    %43 = vector.broadcast %cst_15 : f32 to vector<8x128xf32>
    %44 = arith.select %35, %42, %43 : vector<8x128xi1>, vector<8x128xf32>
    %cst_16 = arith.constant dense<0.000000e+00> : vector<8xf32>
    %45 = vector.multi_reduction <add>, %44, %cst_16 [1] : vector<8x128xf32> to vector<8xf32>
    %46 = vector.shape_cast %45 : vector<8xf32> to vector<8x1xf32>
    %47 = tpu.reciprocal %46 {approx = true} : vector<8x1xf32> -> vector<8x1xf32>
    %48 = vector.broadcast %47 : vector<8x1xf32> to vector<8x128xf32>
    %49 = arith.mulf %44, %48 : vector<8x128xf32>
    %50 = vector.extract_strided_slice %49 {offsets = [0, 0], sizes = [8, 8], strides = [1, 1]} : vector<8x128xf32> to vector<8x8xf32>
    %c0_17 = arith.constant 0 : index
    %c0_18 = arith.constant 0 : index
    %51 = vector.load %arg7[%c0_17, %c0_18] : memref<8x8xf32, #tpu.memory_space<vmem>>, vector<8x8xf32>
    tpu.vector_store %arg7[%c0_17, %c0_18], %50 {strides = array<i32>} : memref<8x8xf32, #tpu.memory_space<vmem>>, vector<8x8xf32>,
    %c0_19 = arith.constant 0 : index
    %c0_20 = arith.constant 0 : index
    %52 = vector.load %arg4[%c0_19, %c0_20] : memref<128x256xf32, #tpu.memory_space<vmem>>, vector<128x256xf32>
    %cst_21 = arith.constant dense<0.000000e+00> : vector<8x256xf32>
    %53 = tpu.matmul %49, %52, %cst_21 {dimension_numbers = #tpu.dot_dimension_numbers<[1], [0], [0], [1], [0, 0, 1, 1], [], []>} : vector<8x128xf32>, vector<128x256xf32>, vector<8x256xf32> -> vector<8x256xf32>
    %54 = arith.mulf %10, %53 : vector<8x256xf32>
    %c0_22 = arith.constant 0 : index
    %c0_23 = arith.constant 0 : index
    %55 = vector.load %arg5[%c0_22, %c0_23] : memref<256x128xf32, #tpu.memory_space<vmem>>, vector<256x128xf32>
    %cst_24 = arith.constant dense<0.000000e+00> : vector<8x128xf32>
    %56 = tpu.matmul %54, %55, %cst_24 {dimension_numbers = #tpu.dot_dimension_numbers<[1], [0], [0], [1], [0, 0, 1, 1], [], []>} : vector<8x256xf32>, vector<256x128xf32>, vector<8x128xf32> -> vector<8x128xf32>
    %c0_25 = arith.constant 0 : index
    %c0_26 = arith.constant 0 : index
    %57 = vector.load %arg6[%c0_25, %c0_26] : memref<8x128xf32, #tpu.memory_space<vmem>>, vector<8x128xf32>
    tpu.vector_store %arg6[%c0_25, %c0_26], %56 {strides = array<i32>} : memref<8x128xf32, #tpu.memory_space<vmem>>, vector<8x128xf32>,
    return
  }
  func.func @transform_0(%arg0: i32) -> (i32, i32) {
    %c0_i32 = arith.constant 0 : i32
    %c0_i32_0 = arith.constant 0 : i32
    return %arg0, %c0_i32 : i32, i32
  }
  func.func @transform_1(%arg0: i32) -> (i32, i32) {
    %c0_i32 = arith.constant 0 : i32
    %c0_i32_0 = arith.constant 0 : i32
    %c0_i32_1 = arith.constant 0 : i32
    return %c0_i32, %c0_i32_0 : i32, i32
  }
  func.func @transform_2(%arg0: i32) -> (i32, i32) {
    %c0_i32 = arith.constant 0 : i32
    %c0_i32_0 = arith.constant 0 : i32
    %c0_i32_1 = arith.constant 0 : i32
    return %c0_i32, %c0_i32_0 : i32, i32
  }
  func.func @transform_3(%arg0: i32) -> (i32, i32) {
    %c0_i32 = arith.constant 0 : i32
    %c0_i32_0 = arith.constant 0 : i32
    %c0_i32_1 = arith.constant 0 : i32
    return %c0_i32, %c0_i32_0 : i32, i32
  }
  func.func @transform_4(%arg0: i32) -> (i32, i32) {
    %c0_i32 = arith.constant 0 : i32
    %c0_i32_0 = arith.constant 0 : i32
    %c0_i32_1 = arith.constant 0 : i32
    return %c0_i32, %c0_i32_0 : i32, i32
  }
  func.func @transform_5(%arg0: i32) -> (i32, i32) {
    %c0_i32 = arith.constant 0 : i32
    %c0_i32_0 = arith.constant 0 : i32
    return %arg0, %c0_i32 : i32, i32
  }
  func.func @transform_6(%arg0: i32) -> (i32, i32) {
    %c0_i32 = arith.constant 0 : i32
    %c0_i32_0 = arith.constant 0 : i32
    return %arg0, %c0_i32 : i32, i32
  }
}

module attributes {stable_mosaic.version = 11 : i64} {
  func.func @_moe_gate_kernel(%arg0: i32, %arg1: memref<8x32xf32, #tpu.memory_space<vmem>>, %arg2: memref<32x128xf32, #tpu.memory_space<vmem>>, %arg3: memref<32x256xbf16, #tpu.memory_space<vmem>>, %arg4: memref<128x256xf32, #tpu.memory_space<vmem>>, %arg5: memref<256x128xf32, #tpu.memory_space<vmem>>, %arg6: memref<8x128xf32, #tpu.memory_space<vmem>>, %arg7: memref<8x8xf32, #tpu.memory_space<vmem>>) attributes {dimension_semantics = [#tpu.dimension_semantics<parallel>], iteration_bounds = array<i64: 1>, scalar_prefetch = 0 : i64, scratch_operands = 0 : i64, tpu.core_type = #tpu.core_type<tc>, window_params = [{transform_indices = @transform_0, window_bounds = array<i64: 8, 32>}, {pipeline_mode = #tpu.pipeline_mode<synchronous>, transform_indices = @transform_1, window_bounds = array<i64: 32, 128>}, {pipeline_mode = #tpu.pipeline_mode<synchronous>, transform_indices = @transform_2, window_bounds = array<i64: 32, 256>}, {pipeline_mode = #tpu.pipeline_mode<synchronous>, transform_indices = @transform_3, window_bounds = array<i64: 128, 256>}, {pipeline_mode = #tpu.pipeline_mode<synchronous>, transform_indices = @transform_4, window_bounds = array<i64: 256, 128>}, {transform_indices = @transform_5, window_bounds = array<i64: 8, 128>}, {transform_indices = @transform_6, window_bounds = array<i64: 8, 8>}]} {
    %c0 = arith.constant 0 : index
    %c0_0 = arith.constant 0 : index
    %0 = vector.load %arg1[%c0, %c0_0] : memref<8x32xf32, #tpu.memory_space<vmem>>, vector<8x32xf32>
    %c0_1 = arith.constant 0 : index
    %c0_2 = arith.constant 0 : index
    %1 = vector.load %arg2[%c0_1, %c0_2] : memref<32x128xf32, #tpu.memory_space<vmem>>, vector<32x128xf32>
    %cst = arith.constant dense<0.000000e+00> : vector<8x128xf32>
    %2 = tpu.matmul %0, %1, %cst {dimension_numbers = #tpu.dot_dimension_numbers<[1], [0], [0], [1], [0, 0, 1, 1], [], []>} : vector<8x32xf32>, vector<32x128xf32>, vector<8x128xf32> -> vector<8x128xf32>
    %3 = tpu.iota {dimensions = array<i32: 1>} : vector<8x128xi32>
    %c8_i32 = arith.constant 8 : i32
    %4 = vector.broadcast %c8_i32 : i32 to vector<8x128xi32>
    %5 = arith.cmpi slt, %3, %4 : vector<8x128xi32>
    %cst_3 = arith.constant -1.000000e+30 : f32
    %6 = vector.broadcast %cst_3 : f32 to vector<8x128xf32>
    %7 = arith.select %5, %2, %6 : vector<8x128xi1>, vector<8x128xf32>
    %8 = arith.truncf %0 : vector<8x32xf32> to vector<8x32xbf16>
    %c0_4 = arith.constant 0 : index
    %c0_5 = arith.constant 0 : index
    %9 = vector.load %arg3[%c0_4, %c0_5] : memref<32x256xbf16, #tpu.memory_space<vmem>>, vector<32x256xbf16>
    %cst_6 = arith.constant dense<0.000000e+00> : vector<8x256xf32>
    %10 = tpu.matmul %8, %9, %cst_6 {dimension_numbers = #tpu.dot_dimension_numbers<[1], [0], [0], [1], [0, 0, 1, 1], [], []>} : vector<8x32xbf16>, vector<32x256xbf16>, vector<8x256xf32> -> vector<8x256xf32>
    %false = arith.constant false
    %11 = vector.broadcast %false : i1 to vector<8x128xi1>
    %cst_7 = arith.constant dense<0xFF800000> : vector<8xf32>
    %12 = vector.multi_reduction <maximumf>, %7, %cst_7 [1] : vector<8x128xf32> to vector<8xf32>
    %13 = vector.shape_cast %12 : vector<8xf32> to vector<8x1xf32>
    %14 = vector.broadcast %13 : vector<8x1xf32> to vector<8x128xf32>
    %15 = arith.cmpf oeq, %7, %14 : vector<8x128xf32>
    %c128_i32 = arith.constant 128 : i32
    %16 = vector.broadcast %c128_i32 : i32 to vector<8x128xi32>
    %17 = arith.select %15, %3, %16 : vector<8x128xi1>, vector<8x128xi32>
    %cst_8 = arith.constant dense<2147483647> : vector<8xi32>
    %18 = vector.multi_reduction <minsi>, %17, %cst_8 [1] : vector<8x128xi32> to vector<8xi32>
    %19 = vector.shape_cast %18 : vector<8xi32> to vector<8x1xi32>
    %20 = vector.broadcast %19 : vector<8x1xi32> to vector<8x128xi32>
    %21 = arith.cmpi eq, %3, %20 : vector<8x128xi32>
    %22 = arith.ori %11, %21 : vector<8x128xi1>
    %cst_9 = arith.constant -1.000000e+30 : f32
    %23 = vector.broadcast %cst_9 : f32 to vector<8x128xf32>
    %24 = arith.select %21, %23, %7 : vector<8x128xi1>, vector<8x128xf32>
    %cst_10 = arith.constant dense<0xFF800000> : vector<8xf32>
    %25 = vector.multi_reduction <maximumf>, %24, %cst_10 [1] : vector<8x128xf32> to vector<8xf32>
    %26 = vector.shape_cast %25 : vector<8xf32> to vector<8x1xf32>
    %27 = vector.broadcast %26 : vector<8x1xf32> to vector<8x128xf32>
    %28 = arith.cmpf oeq, %24, %27 : vector<8x128xf32>
    %c128_i32_11 = arith.constant 128 : i32
    %29 = vector.broadcast %c128_i32_11 : i32 to vector<8x128xi32>
    %30 = arith.select %28, %3, %29 : vector<8x128xi1>, vector<8x128xi32>
    %cst_12 = arith.constant dense<2147483647> : vector<8xi32>
    %31 = vector.multi_reduction <minsi>, %30, %cst_12 [1] : vector<8x128xi32> to vector<8xi32>
    %32 = vector.shape_cast %31 : vector<8xi32> to vector<8x1xi32>
    %33 = vector.broadcast %32 : vector<8x1xi32> to vector<8x128xi32>
    %34 = arith.cmpi eq, %3, %33 : vector<8x128xi32>
    %35 = arith.ori %22, %34 : vector<8x128xi1>
    %cst_13 = arith.constant -1.000000e+30 : f32
    %36 = vector.broadcast %cst_13 : f32 to vector<8x128xf32>
    %37 = arith.select %35, %7, %36 : vector<8x128xi1>, vector<8x128xf32>
    %cst_14 = arith.constant dense<0xFF800000> : vector<8xf32>
    %38 = vector.multi_reduction <maximumf>, %37, %cst_14 [1] : vector<8x128xf32> to vector<8xf32>
    %39 = vector.shape_cast %38 : vector<8xf32> to vector<8x1xf32>
    %40 = vector.broadcast %39 : vector<8x1xf32> to vector<8x128xf32>
    %41 = arith.subf %37, %40 : vector<8x128xf32>
    %42 = math.exp %41 : vector<8x128xf32>
    %cst_15 = arith.constant 0.000000e+00 : f32
    %43 = vector.broadcast %cst_15 : f32 to vector<8x128xf32>
    %44 = arith.select %35, %42, %43 : vector<8x128xi1>, vector<8x128xf32>
    %cst_16 = arith.constant dense<0.000000e+00> : vector<8xf32>
    %45 = vector.multi_reduction <add>, %44, %cst_16 [1] : vector<8x128xf32> to vector<8xf32>
    %46 = vector.shape_cast %45 : vector<8xf32> to vector<8x1xf32>
    %47 = tpu.reciprocal %46 {approx = true} : vector<8x1xf32> -> vector<8x1xf32>
    %48 = vector.broadcast %47 : vector<8x1xf32> to vector<8x128xf32>
    %49 = arith.mulf %44, %48 : vector<8x128xf32>
    %50 = vector.extract_strided_slice %49 {offsets = [0, 0], sizes = [8, 8], strides = [1, 1]} : vector<8x128xf32> to vector<8x8xf32>
    %c0_17 = arith.constant 0 : index
    %c0_18 = arith.constant 0 : index
    %51 = vector.load %arg7[%c0_17, %c0_18] : memref<8x8xf32, #tpu.memory_space<vmem>>, vector<8x8xf32>
    tpu.vector_store %arg7[%c0_17, %c0_18], %50 {strides = array<i32>} : memref<8x8xf32, #tpu.memory_space<vmem>>, vector<8x8xf32>,
    %c0_19 = arith.constant 0 : index
    %c0_20 = arith.constant 0 : index
    %52 = vector.load %arg4[%c0_19, %c0_20] : memref<128x256xf32, #tpu.memory_space<vmem>>, vector<128x256xf32>
    %cst_21 = arith.constant dense<0.000000e+00> : vector<8x256xf32>
    %53 = tpu.matmul %49, %52, %cst_21 {dimension_numbers = #tpu.dot_dimension_numbers<[1], [0], [0], [1], [0, 0, 1, 1], [], []>} : vector<8x128xf32>, vector<128x256xf32>, vector<8x256xf32> -> vector<8x256xf32>
    %54 = arith.mulf %10, %53 : vector<8x256xf32>
    %c0_22 = arith.constant 0 : index
    %c0_23 = arith.constant 0 : index
    %55 = vector.load %arg5[%c0_22, %c0_23] : memref<256x128xf32, #tpu.memory_space<vmem>>, vector<256x128xf32>
    %cst_24 = arith.constant dense<0.000000e+00> : vector<8x128xf32>
    %56 = tpu.matmul %54, %55, %cst_24 {dimension_numbers = #tpu.dot_dimension_numbers<[1], [0], [0], [1], [0, 0, 1, 1], [], []>} : vector<8x256xf32>, vector<256x128xf32>, vector<8x128xf32> -> vector<8x128xf32>
    %c0_25 = arith.constant 0 : index
    %c0_26 = arith.constant 0 : index
    %57 = vector.load %arg6[%c0_25, %c0_26] : memref<8x128xf32, #tpu.memory_space<vmem>>, vector<8x128xf32>
    tpu.vector_store %arg6[%c0_25, %c0_26], %56 {strides = array<i32>} : memref<8x128xf32, #tpu.memory_space<vmem>>, vector<8x128xf32>,
    return
  }
  func.func @transform_0(%arg0: i32) -> (i32, i32) {
    %c0_i32 = arith.constant 0 : i32
    %c0_i32_0 = arith.constant 0 : i32
    return %arg0, %c0_i32 : i32, i32
  }
  func.func @transform_1(%arg0: i32) -> (i32, i32) {
    %c0_i32 = arith.constant 0 : i32
    %c0_i32_0 = arith.constant 0 : i32
    %c0_i32_1 = arith.constant 0 : i32
    return %c0_i32, %c0_i32_0 : i32, i32
  }
  func.func @transform_2(%arg0: i32) -> (i32, i32) {
    %c0_i32 = arith.constant 0 : i32
    %c0_i32_0 = arith.constant 0 : i32
    %c0_i32_1 = arith.constant 0 : i32
    return %c0_i32, %c0_i32_0 : i32, i32
  }
  func.func @transform_3(%arg0: i32) -> (i32, i32) {
    %c0_i32 = arith.constant 0 : i32
    %c0_i32_0 = arith.constant 0 : i32
    %c0_i32_1 = arith.constant 0 : i32
    return %c0_i32, %c0_i32_0 : i32, i32
  }
  func.func @transform_4(%arg0: i32) -> (i32, i32) {
    %c0_i32 = arith.constant 0 : i32
    %c0_i32_0 = arith.constant 0 : i32
    %c0_i32_1 = arith.constant 0 : i32
    return %c0_i32, %c0_i32_0 : i32, i32
  }
  func.func @transform_5(%arg0: i32) -> (i32, i32) {
    %c0_i32 = arith.constant 0 : i32
    %c0_i32_0 = arith.constant 0 : i32
    return %arg0, %c0_i32 : i32, i32
  }
  func.func @transform_6(%arg0: i32) -> (i32, i32) {
    %c0_i32 = arith.constant 0 : i32
    %c0_i32_0 = arith.constant 0 : i32
    return %arg0, %c0_i32 : i32, i32
  }
}

</mosaic_0001>

<llo_original>
// kernel: tpu_custom_call.1
$region0: #{tpu_custom_call.1}
  #allocation0 [shape = 'u32[]', space=smem, size = 0x4, offset = 0x4, fixed_abs, tag = 'smem constant byte address 0x4 - core index']
  #allocation1 [shape = 'u32[144,128]{1,0:T(1,128)}', space=vmem, size = 0x12000, scoped, tag = 'internal scratch']
  %s0 = inlined_call_operand.hbm [shape: f32[8,32], index: 0, kind: input, shape index: {}]
  %s1 = inlined_call_operand.hbm [shape: f32[32,128], index: 1, kind: input, shape index: {}]
  %s2 = inlined_call_operand.hbm [shape: bf16[32,256], index: 2, kind: input, shape index: {}]
  %s3 = inlined_call_operand.hbm [shape: f32[128,256], index: 3, kind: input, shape index: {}]
  %s4 = inlined_call_operand.hbm [shape: f32[256,128], index: 4, kind: input, shape index: {}]
  %s5 = inlined_call_operand.hbm [shape: f32[8,128], index: 5, kind: output, shape index: {0}]
  %s6 = inlined_call_operand.hbm [shape: f32[8,8], index: 6, kind: output, shape index: {1}]
  %7 = xla_tuple %s5, %s6
  %s8 = sld [smem:[#allocation0]]
  $region58: #{tpu_custom_call.1} parent=0
    _
  %s10 = ssub.s32 1, %s8
  %s11 = scalar_select 0, %s10, %s8
  $region1: #{tpu_custom_call.1} parent=0
    #allocation2 [shape = 'u8[4096]{0}', space=vmem, size = 0x1000, scoped, tag = 'input window, operand 0, single buffered']
    #allocation3 [shape = 's32[1]{0}', space=sflag, size = 0x4, scoped, tag = 'scoped memory for tpu_custom_call.1']
    #allocation4 [shape = 's32[1]{0}', space=sflag, size = 0x4, scoped, tag = 'scoped memory for tpu_custom_call.1']
    #allocation5 [shape = 'u8[16384]{0}', space=vmem, size = 0x4000, scoped, tag = 'input window, operand 1, single buffered']
    #allocation6 [shape = 's32[1]{0}', space=sflag, size = 0x4, scoped, tag = 'scoped memory for tpu_custom_call.1']
    #allocation7 [shape = 'u8[16384]{0}', space=vmem, size = 0x4000, scoped, tag = 'input window, operand 2, single buffered']
    #allocation8 [shape = 'u8[131072]{0}', space=vmem, size = 0x20000, scoped, tag = 'input window, operand 3, single buffered']
    #allocation9 [shape = 's32[1]{0}', space=sflag, size = 0x4, scoped, tag = 'scoped memory for tpu_custom_call.1']
    #allocation10 [shape = 'u8[131072]{0}', space=vmem, size = 0x20000, scoped, tag = 'input window, operand 4, single buffered']
    #allocation11 [shape = 'u8[4096]{0}', space=vmem, size = 0x1000, scoped, tag = 'output window, operand 0, single buffered']
    #allocation12 [shape = 'u8[4096]{0}', space=vmem, size = 0x1000, scoped, tag = 'output window, operand 1, single buffered']
    #allocation13 [shape = 's32[1]{0}', space=sflag, size = 0x4, scoped, tag = 'scoped memory for tpu_custom_call.1']
    %12 = vsyncpa [#allocation3], 0
    %13 = vsyncpa [#allocation6], 0
    %14 = vsyncpa [#allocation9], 0
    %15 = vsyncpa [#allocation4], 0
    %16 = vsyncpa [#allocation13], 0
    // Predicated region
    $region2: #{tpu_custom_call.1} parent=1 // pred_check
      _
    $region3: #{tpu_custom_call.1} parent=1 // pred_check_branch
      %18 = sbr.rel (0) target = $region5
    $region4: #{tpu_custom_call.1} parent=1 // pred_region
      %s20 = ssub.s32 128, 128
      %21 = vsyncadd [#allocation3], %s20
      %s23 = sshll.u32 [#allocation2], 4
      %s24 = int_to_ptr.vmem [resolvable:$true] %s23
      %26 = dma.hbm_to_vmem [thread:$0]  %s0, 128, %s24, [#allocation3]
    $region5: #{tpu_custom_call.1} parent=1 // pred_fallthru
      _
    // Predicated region
    $region6: #{tpu_custom_call.1} parent=1 // pred_check
      _
    $region7: #{tpu_custom_call.1} parent=1 // pred_check_branch
      %28 = sbr.rel (0) target = $region9
    $region8: #{tpu_custom_call.1} parent=1 // pred_region
      %s30 = ssub.s32 512, 512
      %31 = vsyncadd [#allocation6], %s30
      %s32 = sshll.u32 [#allocation5], 4
      %s33 = int_to_ptr.vmem [resolvable:$true] %s32
      %38 = dma.hbm_to_vmem [thread:$0]  %s1, 512, %s33, [#allocation6], 128, 128, 8
    $region9: #{tpu_custom_call.1} parent=1 // pred_fallthru
      _
    // Predicated region
    $region10: #{tpu_custom_call.1} parent=1 // pred_check
      _
    $region11: #{tpu_custom_call.1} parent=1 // pred_check_branch
      %40 = sbr.rel (0) target = $region13
    $region12: #{tpu_custom_call.1} parent=1 // pred_region
      %s42 = ssub.s32 512, 512
      %43 = vsyncadd [#allocation6], %s42
      %s44 = sshll.u32 [#allocation7], 4
      %s45 = int_to_ptr.vmem [resolvable:$true] %s44
      %50 = dma.hbm_to_vmem [thread:$0]  %s2, 512, %s45, [#allocation6], 128, 128, 8
    $region13: #{tpu_custom_call.1} parent=1 // pred_fallthru
      _
    // Predicated region
    $region14: #{tpu_custom_call.1} parent=1 // pred_check
      _
    $region15: #{tpu_custom_call.1} parent=1 // pred_check_branch
      %52 = sbr.rel (0) target = $region17
    $region16: #{tpu_custom_call.1} parent=1 // pred_region
      %s54 = ssub.s32 4096, 4096
      %55 = vsyncadd [#allocation9], %s54
      %s56 = sshll.u32 [#allocation8], 4
      %s57 = int_to_ptr.vmem [resolvable:$true] %s56
      %62 = dma.hbm_to_vmem [thread:$0]  %s3, 4096, %s57, [#allocation9], 256, 256, 16
    $region17: #{tpu_custom_call.1} parent=1 // pred_fallthru
      _
    // Predicated region
    $region18: #{tpu_custom_call.1} parent=1 // pred_check
      _
    $region19: #{tpu_custom_call.1} parent=1 // pred_check_branch
      %64 = sbr.rel (0) target = $region21
    $region20: #{tpu_custom_call.1} parent=1 // pred_region
      %s66 = ssub.s32 4096, 4096
      %67 = vsyncadd [#allocation9], %s66
      %s68 = sshll.u32 [#allocation10], 4
      %s69 = int_to_ptr.vmem [resolvable:$true] %s68
      %74 = dma.hbm_to_vmem [thread:$0]  %s4, 4096, %s69, [#allocation9], 128, 128, 8
    $region21: #{tpu_custom_call.1} parent=1 // pred_fallthru
      _
    // Predicated region
    $region22: #{tpu_custom_call.1} parent=1 // pred_check
      _
    $region23: #{tpu_custom_call.1} parent=1 // pred_check_branch
      %76 = sbr.rel (0) target = $region25
    $region24: #{tpu_custom_call.1} parent=1 // pred_region
      %77 = dma.done [#allocation3], 128
    $region25: #{tpu_custom_call.1} parent=1 // pred_fallthru
      _
    // Predicated region
    $region26: #{tpu_custom_call.1} parent=1 // pred_check
      _
    $region27: #{tpu_custom_call.1} parent=1 // pred_check_branch
      %79 = sbr.rel (0) target = $region29
    $region28: #{tpu_custom_call.1} parent=1 // pred_region
      %80 = dma.done [#allocation6], 512
    $region29: #{tpu_custom_call.1} parent=1 // pred_fallthru
      _
    // Predicated region
    $region30: #{tpu_custom_call.1} parent=1 // pred_check
      _
    $region31: #{tpu_custom_call.1} parent=1 // pred_check_branch
      %82 = sbr.rel (0) target = $region33
    $region32: #{tpu_custom_call.1} parent=1 // pred_region
      %83 = dma.done [#allocation6], 512
    $region33: #{tpu_custom_call.1} parent=1 // pred_fallthru
      _
    // Predicated region
    $region34: #{tpu_custom_call.1} parent=1 // pred_check
      _
    $region35: #{tpu_custom_call.1} parent=1 // pred_check_branch
      %85 = sbr.rel (0) target = $region37
    $region36: #{tpu_custom_call.1} parent=1 // pred_region
      %86 = dma.done [#allocation9], 4096
    $region37: #{tpu_custom_call.1} parent=1 // pred_fallthru
      _
    // Predicated region
    $region38: #{tpu_custom_call.1} parent=1 // pred_check
      _
    $region39: #{tpu_custom_call.1} parent=1 // pred_check_branch
      %88 = sbr.rel (0) target = $region41
    $region40: #{tpu_custom_call.1} parent=1 // pred_region
      %89 = dma.done [#allocation9], 4096
    $region41: #{tpu_custom_call.1} parent=1 // pred_fallthru
      _
    %v91 = vld [vmem:[#allocation2] sm:$0xff]
    %v92 = vld [vmem:[#allocation5] sm:$0xff]
    %v93 = vld [vmem:[#allocation5 + $0x8] sm:$0xff]
    %v94 = vld [vmem:[#allocation5 + $0x10] sm:$0xff]
    %v95 = vld [vmem:[#allocation5 + $0x18] sm:$0xff]
    %vm96 = vcmask 261120
    %v98 = vsel %vm96, %v91, 0
    %100 = vmatprep.subr.mxu0 0.0
    %101 = vmatpush1.msra.mxu0 %v92
    %102 = vmatprep.subr.mxu0 0.0
    %103 = vmatpush1.msra.mxu0 %v93
    %104 = vmatprep.subr.mxu0 0.0
    %105 = vmatpush1.msra.mxu0 %v94
    %106 = vmatprep.subr.mxu0 0.0
    %107 = vmatpush1.msra.mxu0 %v95
    %108 = vmatprep.subr.mxu0 0.0
    %109 = vmatpush1.msra.mxu0 0.0
    %110 = vmatprep.subr.mxu0 0.0
    %111 = vmatpush1.msra.mxu0 0.0
    %112 = vmatprep.subr.mxu0 0.0
    %113 = vmatpush1.msra.mxu0 0.0
    %114 = vmatprep.subr.mxu0 0.0
    %115 = vmatpush1.msra.mxu0 0.0
    %116 = vmatprep.subr.mxu0 0.0
    %117 = vmatpush1.msra.mxu0 0.0
    %118 = vmatprep.subr.mxu0 0.0
    %119 = vmatpush1.msra.mxu0 0.0
    %120 = vmatprep.subr.mxu0 0.0
    %121 = vmatpush1.msra.mxu0 0.0
    %122 = vmatprep.subr.mxu0 0.0
    %123 = vmatpush1.msra.mxu0 0.0
    %124 = vmatprep.subr.mxu0 0.0
    %125 = vmatpush1.msra.mxu0 0.0
    %126 = vmatprep.subr.mxu0 0.0
    %127 = vmatpush1.msra.mxu0 0.0
    %128 = vmatprep.subr.mxu0 0.0
    %129 = vmatpush1.msra.mxu0 0.0
    %130 = vmatprep.subr.mxu0 0.0
    %131 = vmatpush1.msra.mxu0 0.0
    %132 = vmatprep.subr.mxu0 0.0
    %133 = vmatpush1.msra.mxu0 0.0
    %134 = vmatprep.subr.mxu0 0.0
    %135 = vmatpush1.msra.mxu0 0.0
    %136 = vmatprep.subr.mxu0 0.0
    %137 = vmatpush1.msra.mxu0 0.0
    %138 = vmatprep.subr.mxu0 0.0
    %139 = vmatpush1.msra.mxu0 0.0
    %140 = vmatprep.subr.mxu0 0.0
    %141 = vmatpush1.msra.mxu0 0.0
    %142 = vmatprep.subr.mxu0 0.0
    %143 = vmatpush1.msra.mxu0 0.0
    %144 = vmatprep.subr.mxu0 0.0
    %145 = vmatpush1.msra.mxu0 0.0
    %146 = vmatprep.subr.mxu0 0.0
    %147 = vmatpush1.msra.mxu0 0.0
    %148 = vmatprep.subr.mxu0 0.0
    %149 = vmatpush1.msra.mxu0 0.0
    %150 = vmatprep.subr.mxu0 0.0
    %151 = vmatpush1.msra.mxu0 0.0
    %152 = vmatprep.subr.mxu0 0.0
    %153 = vmatpush1.msra.mxu0 0.0
    %154 = vmatprep.subr.mxu0 0.0
    %155 = vmatpush1.msra.mxu0 0.0
    %156 = vmatprep.subr.mxu0 0.0
    %157 = vmatpush1.msra.mxu0 0.0
    %158 = vmatprep.subr.mxu0 0.0
    %159 = vmatpush1.msra.mxu0 0.0
    %160 = vmatprep.subr.mxu0 0.0
    %161 = vmatpush1.msra.mxu0 0.0
    %162 = vmatprep.subr.mxu0 0.0
    %163 = vmatpush1.msra.mxu0 0.0
    %164 = vmatprep.mubr.f32.mxu0 0.0
    %165 = vmatmul.mubr.f32.gmra.mrb[0].mxu0 %v98
    %v166 = vpop.f32.mrb[0].mxu0
    %v167 = vadd.f32 0.0, %v166
    %v168 = vpop.f32.mrb[0].mxu0
    %169 = vdwg.mxu0
    %v170 = vlaneseq
    %v171 = vand.u32 %v170, 127
    %vm172 = vcmp.lt.s32.totalorder %v171, 8
    %v173 = vsel %vm172, %v167, -1e+30
    %v174 = vpack.c.bf16 %v91, %v91
    %v175 = vld [vmem:[#allocation7] sm:$0xff]
    %v176 = vld [vmem:[#allocation7 + $0x8] sm:$0xff]
    %v177 = vld [vmem:[#allocation7 + $0x10] sm:$0xff]
    %v178 = vld [vmem:[#allocation7 + $0x18] sm:$0xff]
    %v183 = vunpack.c.l.b16 %v175
    %v184 = vunpack.c.h.b16 %v175
    %v185 = vunpack.c.l.b16 %v176
    %v186 = vunpack.c.h.b16 %v176
    %v187 = vunpack.c.l.b16 %v177
    %v188 = vunpack.c.h.b16 %v177
    %v189 = vunpack.c.l.b16 %v178
    %v190 = vunpack.c.h.b16 %v178
    %v191 = vpack.c.b16 %v185, %v183
    %v192 = vpack.c.b16 %v186, %v184
    %v193 = vpack.c.b16 %v189, %v187
    %v194 = vpack.c.b16 %v190, %v188
    %v200 = vsel %vm96, %v174, 0
    %202 = vmatprep.subr.bf16.mxu0 %v192
    %203 = vmatpush1.bf16.msra.mxu0 %v191
    %204 = vmatprep.subr.bf16.mxu0 %v194
    %205 = vmatpush1.bf16.msra.mxu0 %v193
    %206 = vmatprep.subr.bf16.mxu0 0
    %207 = vmatpush1.bf16.msra.mxu0 0
    %208 = vmatprep.subr.bf16.mxu0 0
    %209 = vmatpush1.bf16.msra.mxu0 0
    %210 = vmatprep.subr.bf16.mxu0 0
    %211 = vmatpush1.bf16.msra.mxu0 0
    %212 = vmatprep.subr.bf16.mxu0 0
    %213 = vmatpush1.bf16.msra.mxu0 0
    %214 = vmatprep.subr.bf16.mxu0 0
    %215 = vmatpush1.bf16.msra.mxu0 0
    %216 = vmatprep.subr.bf16.mxu0 0
    %217 = vmatpush1.bf16.msra.mxu0 0
    %218 = vmatprep.subr.bf16.mxu0 0
    %219 = vmatpush1.bf16.msra.mxu0 0
    %220 = vmatprep.subr.bf16.mxu0 0
    %221 = vmatpush1.bf16.msra.mxu0 0
    %222 = vmatprep.subr.bf16.mxu0 0
    %223 = vmatpush1.bf16.msra.mxu0 0
    %224 = vmatprep.subr.bf16.mxu0 0
    %225 = vmatpush1.bf16.msra.mxu0 0
    %226 = vmatprep.subr.bf16.mxu0 0
    %227 = vmatpush1.bf16.msra.mxu0 0
    %228 = vmatprep.subr.bf16.mxu0 0
    %229 = vmatpush1.bf16.msra.mxu0 0
    %230 = vmatprep.subr.bf16.mxu0 0
    %231 = vmatpush1.bf16.msra.mxu0 0
    %232 = vmatprep.subr.bf16.mxu0 0
    %233 = vmatpush1.bf16.msra.mxu0 0
    %234 = vmatprep.mubr.bf16.mxu0 0
    %235 = vmatmul.mubr.bf16.gmra.mrb[0].mxu0 %v200
    %v236 = vpop.f32.mrb[0].mxu0
    %v237 = vadd.f32 0.0, %v236
    %v238 = vpop.f32.mrb[0].mxu0
    %v239 = vadd.f32 0.0, %v238
    %v240 = vpop.f32.mrb[0].mxu0
    %v241 = vpop.f32.mrb[0].mxu0
    %242 = vdwg.mxu0
    %243 = vmax.xlane.f32.xlu0 %v173
    %v244 = vpop.xlane.xlu0 %243
    %vm245 = vcmp.eq.f32.partialorder %v173, %v244
    %v246 = vsel %vm245, %v171, 128
    %v247 = vand.u32 %v246, 65535
    %v248 = vshra.s32 %v246, 16
    %v249 = vcvt.s32.f32 %v247
    %v250 = vcvt.s32.f32 %v248
    %251 = vmin.xlane.f32.xlu0 %v250
    %v252 = vpop.xlane.xlu0 %251
    %vm253 = vcmp.eq.f32.partialorder %v250, %v252
    %v254 = vsel %vm253, %v249, inf
    %255 = vmin.xlane.f32.xlu0 %v254
    %v256 = vpop.xlane.xlu0 %255
    %v257 = vcvt.f32.s32 %v256
    %v258 = vcvt.f32.s32 %v252
    %v259 = vshll.u32 %v258, 16
    %v260 = vadd.s32 %v259, %v257
    %vm261 = vcmp.eq.s32.totalorder %v171, %v260
    %v262 = vsel %vm261, -1e+30, %v173
    %263 = vmax.xlane.f32.xlu0 %v262
    %v264 = vpop.xlane.xlu0 %263
    %vm265 = vcmp.eq.f32.partialorder %v262, %v264
    %v266 = vsel %vm265, %v171, 128
    %v267 = vand.u32 %v266, 65535
    %v268 = vshra.s32 %v266, 16
    %v269 = vcvt.s32.f32 %v267
    %v270 = vcvt.s32.f32 %v268
    %271 = vmin.xlane.f32.xlu0 %v270
    %v272 = vpop.xlane.xlu0 %271
    %vm273 = vcmp.eq.f32.partialorder %v270, %v272
    %v274 = vsel %vm273, %v269, inf
    %275 = vmin.xlane.f32.xlu0 %v274
    %v276 = vpop.xlane.xlu0 %275
    %v277 = vcvt.f32.s32 %v276
    %v278 = vcvt.f32.s32 %v272
    %v279 = vshll.u32 %v278, 16
    %v280 = vadd.s32 %v279, %v277
    %vm281 = vcmp.eq.s32.totalorder %v171, %v280
    %vm282 = vmor %vm261, %vm281
    %v283 = vsel %vm282, %v173, -1e+30
    %284 = vmax.xlane.f32.xlu0 %v283
    %v285 = vpop.xlane.xlu0 %284
    %v286 = vsub.f32 %v283, %v285
    %v287 = vmul.f32 %v286, 1.442695
    %v288 = vpow.pop %v287
    %v289 = vsel %vm282, %v288, 0.0
    %290 = vadd.xlane.f32.xlu0 %v289
    %v291 = vpop.xlane.xlu0 %290
    %v292 = vrcp.pop %v291
    %v293 = vmul.f32 %v289, %v292
    %vm294 = vcmask 64512
    %295 = vst.msk [vmem:[#allocation12] sm:$0xff] %vm294, %v293
    %v296 = vld [vmem:[#allocation8] sm:$0xff]
    %v297 = vld [vmem:[#allocation8 + $0x8] sm:$0xff]
    %v298 = vld [vmem:[#allocation8 + $0x10] sm:$0xff]
    %v299 = vld [vmem:[#allocation8 + $0x18] sm:$0xff]
    %v300 = vld [vmem:[#allocation8 + $0x20] sm:$0xff]
    %v301 = vld [vmem:[#allocation8 + $0x28] sm:$0xff]
    %v302 = vld [vmem:[#allocation8 + $0x30] sm:$0xff]
    %v303 = vld [vmem:[#allocation8 + $0x38] sm:$0xff]
    %v304 = vld [vmem:[#allocation8 + $0x40] sm:$0xff]
    %v305 = vld [vmem:[#allocation8 + $0x48] sm:$0xff]
    %v306 = vld [vmem:[#allocation8 + $0x50] sm:$0xff]
    %v307 = vld [vmem:[#allocation8 + $0x58] sm:$0xff]
    %v308 = vld [vmem:[#allocation8 + $0x60] sm:$0xff]
    %v309 = vld [vmem:[#allocation8 + $0x68] sm:$0xff]
    %v310 = vld [vmem:[#allocation8 + $0x70] sm:$0xff]
    %v311 = vld [vmem:[#allocation8 + $0x78] sm:$0xff]
    %v312 = vld [vmem:[#allocation8 + $0x80] sm:$0xff]
    %v313 = vld [vmem:[#allocation8 + $0x88] sm:$0xff]
    %v314 = vld [vmem:[#allocation8 + $0x90] sm:$0xff]
    %v315 = vld [vmem:[#allocation8 + $0x98] sm:$0xff]
    %v316 = vld [vmem:[#allocation8 + $0xa0] sm:$0xff]
    %v317 = vld [vmem:[#allocation8 + $0xa8] sm:$0xff]
    %v318 = vld [vmem:[#allocation8 + $0xb0] sm:$0xff]
    %v319 = vld [vmem:[#allocation8 + $0xb8] sm:$0xff]
    %v320 = vld [vmem:[#allocation8 + $0xc0] sm:$0xff]
    %v321 = vld [vmem:[#allocation8 + $0xc8] sm:$0xff]
    %v322 = vld [vmem:[#allocation8 + $0xd0] sm:$0xff]
    %v323 = vld [vmem:[#allocation8 + $0xd8] sm:$0xff]
    %v324 = vld [vmem:[#allocation8 + $0xe0] sm:$0xff]
    %v325 = vld [vmem:[#allocation8 + $0xe8] sm:$0xff]
    %v326 = vld [vmem:[#allocation8 + $0xf0] sm:$0xff]
    %v327 = vld [vmem:[#allocation8 + $0xf8] sm:$0xff]
    %328 = vmatprep.subr.mxu0 %v297
    %329 = vmatpush1.msra.mxu0 %v296
    %330 = vmatprep.subr.mxu0 %v299
    %331 = vmatpush1.msra.mxu0 %v298
    %332 = vmatprep.subr.mxu0 %v301
    %333 = vmatpush1.msra.mxu0 %v300
    %334 = vmatprep.subr.mxu0 %v303
    %335 = vmatpush1.msra.mxu0 %v302
    %336 = vmatprep.subr.mxu0 %v305
    %337 = vmatpush1.msra.mxu0 %v304
    %338 = vmatprep.subr.mxu0 %v307
    %339 = vmatpush1.msra.mxu0 %v306
    %340 = vmatprep.subr.mxu0 %v309
    %341 = vmatpush1.msra.mxu0 %v308
    %342 = vmatprep.subr.mxu0 %v311
    %343 = vmatpush1.msra.mxu0 %v310
    %344 = vmatprep.subr.mxu0 %v313
    %345 = vmatpush1.msra.mxu0 %v312
    %346 = vmatprep.subr.mxu0 %v315
    %347 = vmatpush1.msra.mxu0 %v314
    %348 = vmatprep.subr.mxu0 %v317
    %349 = vmatpush1.msra.mxu0 %v316
    %350 = vmatprep.subr.mxu0 %v319
    %351 = vmatpush1.msra.mxu0 %v318
    %352 = vmatprep.subr.mxu0 %v321
    %353 = vmatpush1.msra.mxu0 %v320
    %354 = vmatprep.subr.mxu0 %v323
    %355 = vmatpush1.msra.mxu0 %v322
    %356 = vmatprep.subr.mxu0 %v325
    %357 = vmatpush1.msra.mxu0 %v324
    %358 = vmatprep.subr.mxu0 %v327
    %359 = vmatpush1.msra.mxu0 %v326
    %360 = vmatprep.subr.mxu0 0.0
    %361 = vmatpush1.msra.mxu0 0.0
    %362 = vmatprep.subr.mxu0 0.0
    %363 = vmatpush1.msra.mxu0 0.0
    %364 = vmatprep.subr.mxu0 0.0
    %365 = vmatpush1.msra.mxu0 0.0
    %366 = vmatprep.subr.mxu0 0.0
    %367 = vmatpush1.msra.mxu0 0.0
    %368 = vmatprep.subr.mxu0 0.0
    %369 = vmatpush1.msra.mxu0 0.0
    %370 = vmatprep.subr.mxu0 0.0
    %371 = vmatpush1.msra.mxu0 0.0
    %372 = vmatprep.subr.mxu0 0.0
    %373 = vmatpush1.msra.mxu0 0.0
    %374 = vmatprep.subr.mxu0 0.0
    %375 = vmatpush1.msra.mxu0 0.0
    %376 = vmatprep.subr.mxu0 0.0
    %377 = vmatpush1.msra.mxu0 0.0
    %378 = vmatprep.subr.mxu0 0.0
    %379 = vmatpush1.msra.mxu0 0.0
    %380 = vmatprep.subr.mxu0 0.0
    %381 = vmatpush1.msra.mxu0 0.0
    %382 = vmatprep.subr.mxu0 0.0
    %383 = vmatpush1.msra.mxu0 0.0
    %384 = vmatprep.subr.mxu0 0.0
    %385 = vmatpush1.msra.mxu0 0.0
    %386 = vmatprep.subr.mxu0 0.0
    %387 = vmatpush1.msra.mxu0 0.0
    %388 = vmatprep.subr.mxu0 0.0
    %389 = vmatpush1.msra.mxu0 0.0
    %390 = vmatprep.subr.mxu0 0.0
    %391 = vmatpush1.msra.mxu0 0.0
    %392 = vmatprep.mubr.f32.mxu0 0.0
    %393 = vmatmul.mubr.f32.gmra.mrb[0].mxu0 %v293
    %v394 = vpop.f32.mrb[0].mxu0
    %v395 = vadd.f32 0.0, %v394
    %v396 = vpop.f32.mrb[0].mxu0
    %v397 = vadd.f32 0.0, %v396
    %398 = vdwg.mxu0
    %v399 = vmul.f32 %v237, %v395
    %v400 = vmul.f32 %v239, %v397
    %v401 = vld [vmem:[#allocation10] sm:$0xff]
    %v402 = vld [vmem:[#allocation10 + $0x8] sm:$0xff]
    %v403 = vld [vmem:[#allocation10 + $0x10] sm:$0xff]
    %v404 = vld [vmem:[#allocation10 + $0x18] sm:$0xff]
    %v405 = vld [vmem:[#allocation10 + $0x20] sm:$0xff]
    %v406 = vld [vmem:[#allocation10 + $0x28] sm:$0xff]
    %v407 = vld [vmem:[#allocation10 + $0x30] sm:$0xff]
    %v408 = vld [vmem:[#allocation10 + $0x38] sm:$0xff]
    %v409 = vld [vmem:[#allocation10 + $0x40] sm:$0xff]
    %v410 = vld [vmem:[#allocation10 + $0x48] sm:$0xff]
    %v411 = vld [vmem:[#allocation10 + $0x50] sm:$0xff]
    %v412 = vld [vmem:[#allocation10 + $0x58] sm:$0xff]
    %v413 = vld [vmem:[#allocation10 + $0x60] sm:$0xff]
    %v414 = vld [vmem:[#allocation10 + $0x68] sm:$0xff]
    %v415 = vld [vmem:[#allocation10 + $0x70] sm:$0xff]
    %v416 = vld [vmem:[#allocation10 + $0x78] sm:$0xff]
    %v417 = vld [vmem:[#allocation10 + $0x80] sm:$0xff]
    %v418 = vld [vmem:[#allocation10 + $0x88] sm:$0xff]
    %v419 = vld [vmem:[#allocation10 + $0x90] sm:$0xff]
    %v420 = vld [vmem:[#allocation10 + $0x98] sm:$0xff]
    %v421 = vld [vmem:[#allocation10 + $0xa0] sm:$0xff]
    %v422 = vld [vmem:[#allocation10 + $0xa8] sm:$0xff]
    %v423 = vld [vmem:[#allocation10 + $0xb0] sm:$0xff]
    %v424 = vld [vmem:[#allocation10 + $0xb8] sm:$0xff]
    %v425 = vld [vmem:[#allocation10 + $0xc0] sm:$0xff]
    %v426 = vld [vmem:[#allocation10 + $0xc8] sm:$0xff]
    %v427 = vld [vmem:[#allocation10 + $0xd0] sm:$0xff]
    %v428 = vld [vmem:[#allocation10 + $0xd8] sm:$0xff]
    %v429 = vld [vmem:[#allocation10 + $0xe0] sm:$0xff]
    %v430 = vld [vmem:[#allocation10 + $0xe8] sm:$0xff]
    %v431 = vld [vmem:[#allocation10 + $0xf0] sm:$0xff]
    %v432 = vld [vmem:[#allocation10 + $0xf8] sm:$0xff]
    %433 = vmatprep.subr.mxu0 0.0
    %434 = vmatpush1.msra.mxu0 %v401
    %435 = vmatprep.subr.mxu0 0.0
    %436 = vmatpush1.msra.mxu0 %v402
    %437 = vmatprep.subr.mxu0 0.0
    %438 = vmatpush1.msra.mxu0 %v403
    %439 = vmatprep.subr.mxu0 0.0
    %440 = vmatpush1.msra.mxu0 %v404
    %441 = vmatprep.subr.mxu0 0.0
    %442 = vmatpush1.msra.mxu0 %v405
    %443 = vmatprep.subr.mxu0 0.0
    %444 = vmatpush1.msra.mxu0 %v406
    %445 = vmatprep.subr.mxu0 0.0
    %446 = vmatpush1.msra.mxu0 %v407
    %447 = vmatprep.subr.mxu0 0.0
    %448 = vmatpush1.msra.mxu0 %v408
    %449 = vmatprep.subr.mxu0 0.0
    %450 = vmatpush1.msra.mxu0 %v409
    %451 = vmatprep.subr.mxu0 0.0
    %452 = vmatpush1.msra.mxu0 %v410
    %453 = vmatprep.subr.mxu0 0.0
    %454 = vmatpush1.msra.mxu0 %v411
    %455 = vmatprep.subr.mxu0 0.0
    %456 = vmatpush1.msra.mxu0 %v412
    %457 = vmatprep.subr.mxu0 0.0
    %458 = vmatpush1.msra.mxu0 %v413
    %459 = vmatprep.subr.mxu0 0.0
    %460 = vmatpush1.msra.mxu0 %v414
    %461 = vmatprep.subr.mxu0 0.0
    %462 = vmatpush1.msra.mxu0 %v415
    %463 = vmatprep.subr.mxu0 0.0
    %464 = vmatpush1.msra.mxu0 %v416
    %465 = vmatprep.subr.mxu0 0.0
    %466 = vmatpush1.msra.mxu0 %v417
    %467 = vmatprep.subr.mxu0 0.0
    %468 = vmatpush1.msra.mxu0 %v418
    %469 = vmatprep.subr.mxu0 0.0
    %470 = vmatpush1.msra.mxu0 %v419
    %471 = vmatprep.subr.mxu0 0.0
    %472 = vmatpush1.msra.mxu0 %v420
    %473 = vmatprep.subr.mxu0 0.0
    %474 = vmatpush1.msra.mxu0 %v421
    %475 = vmatprep.subr.mxu0 0.0
    %476 = vmatpush1.msra.mxu0 %v422
    %477 = vmatprep.subr.mxu0 0.0
    %478 = vmatpush1.msra.mxu0 %v423
    %479 = vmatprep.subr.mxu0 0.0
    %480 = vmatpush1.msra.mxu0 %v424
    %481 = vmatprep.subr.mxu0 0.0
    %482 = vmatpush1.msra.mxu0 %v425
    %483 = vmatprep.subr.mxu0 0.0
    %484 = vmatpush1.msra.mxu0 %v426
    %485 = vmatprep.subr.mxu0 0.0
    %486 = vmatpush1.msra.mxu0 %v427
    %487 = vmatprep.subr.mxu0 0.0
    %488 = vmatpush1.msra.mxu0 %v428
    %489 = vmatprep.subr.mxu0 0.0
    %490 = vmatpush1.msra.mxu0 %v429
    %491 = vmatprep.subr.mxu0 0.0
    %492 = vmatpush1.msra.mxu0 %v430
    %493 = vmatprep.subr.mxu0 0.0
    %494 = vmatpush1.msra.mxu0 %v431
    %495 = vmatprep.subr.mxu0 0.0
    %496 = vmatpush1.msra.mxu0 %v432
    %497 = vmatprep.mubr.f32.mxu0 %v400
    %498 = vmatmul.mubr.f32.gmra.mrb[0].mxu0 %v399
    %v499 = vpop.f32.mrb[0].mxu0
    %v500 = vadd.f32 0.0, %v499
    %v501 = vpop.f32.mrb[0].mxu0
    %502 = vdwg.mxu0
    %503 = vst [vmem:[#allocation11] sm:$0xff] %v500
    // Predicated region
    $region42: #{tpu_custom_call.1} parent=1 // pred_check
      _
    $region43: #{tpu_custom_call.1} parent=1 // pred_check_branch
      %505 = sbr.rel (0) target = $region45
    $region44: #{tpu_custom_call.1} parent=1 // pred_region
      %s507 = ssub.s32 128, 128
      %508 = vsyncadd [#allocation4], %s507
      %s510 = sshll.u32 [#allocation11], 4
      %s511 = int_to_ptr.vmem [resolvable:$true] %s510
      %513 = dma.vmem_to_hbm [thread:$0]  %s511, 128, %s5, [#allocation4]
    $region45: #{tpu_custom_call.1} parent=1 // pred_fallthru
      _
    // Predicated region
    $region46: #{tpu_custom_call.1} parent=1 // pred_check
      _
    $region47: #{tpu_custom_call.1} parent=1 // pred_check_branch
      %515 = sbr.rel (0) target = $region49
    $region48: #{tpu_custom_call.1} parent=1 // pred_region
      %s517 = ssub.s32 128, 128
      %518 = vsyncadd [#allocation13], %s517
      %s520 = sshll.u32 [#allocation12], 4
      %s521 = int_to_ptr.vmem [resolvable:$true] %s520
      %523 = dma.vmem_to_hbm [thread:$0]  %s521, 128, %s6, [#allocation13]
    $region49: #{tpu_custom_call.1} parent=1 // pred_fallthru
      _
    // Predicated region
    $region50: #{tpu_custom_call.1} parent=1 // pred_check
      _
    $region51: #{tpu_custom_call.1} parent=1 // pred_check_branch
      %525 = sbr.rel (0) target = $region53
    $region52: #{tpu_custom_call.1} parent=1 // pred_region
      %526 = dma.done [#allocation4], 128
    $region53: #{tpu_custom_call.1} parent=1 // pred_fallthru
      _
    // Predicated region
    $region54: #{tpu_custom_call.1} parent=1 // pred_check
      _
    $region55: #{tpu_custom_call.1} parent=1 // pred_check_branch
      %528 = sbr.rel (0) target = $region57
    $region56: #{tpu_custom_call.1} parent=1 // pred_region
      %529 = dma.done [#allocation13], 128
    $region57: #{tpu_custom_call.1} parent=1 // pred_fallthru
      _
    %530 = vsyncpa [#allocation3], 1
    %531 = vsyncpa [#allocation6], 1
    %532 = vsyncpa [#allocation9], 1
    %533 = vsyncpa [#allocation4], 1
    %534 = vsyncpa [#allocation13], 1

// kernel: tpu_custom_call.1
$region0: #{tpu_custom_call.1}
  #allocation0 [shape = 'u32[]', space=smem, size = 0x4, offset = 0x4, fixed_abs, tag = 'smem constant byte address 0x4 - core index']
  #allocation1 [shape = 'u32[144,128]{1,0:T(1,128)}', space=vmem, size = 0x12000, scoped, tag = 'internal scratch']
  %s0 = inlined_call_operand.hbm [shape: f32[8,32], index: 0, kind: input, shape index: {}]
  %s1 = inlined_call_operand.hbm [shape: f32[32,128], index: 1, kind: input, shape index: {}]
  %s2 = inlined_call_operand.hbm [shape: bf16[32,256], index: 2, kind: input, shape index: {}]
  %s3 = inlined_call_operand.hbm [shape: f32[128,256], index: 3, kind: input, shape index: {}]
  %s4 = inlined_call_operand.hbm [shape: f32[256,128], index: 4, kind: input, shape index: {}]
  %s5 = inlined_call_operand.hbm [shape: f32[8,128], index: 5, kind: output, shape index: {0}]
  %s6 = inlined_call_operand.hbm [shape: f32[8,8], index: 6, kind: output, shape index: {1}]
  %7 = xla_tuple %s5, %s6
  %s8 = sld [smem:[#allocation0]]
  $region58: #{tpu_custom_call.1} parent=0
    _
  %s10 = ssub.s32 1, %s8
  %s11 = scalar_select 0, %s10, %s8
  $region1: #{tpu_custom_call.1} parent=0
    #allocation2 [shape = 'u8[4096]{0}', space=vmem, size = 0x1000, scoped, tag = 'input window, operand 0, single buffered']
    #allocation3 [shape = 's32[1]{0}', space=sflag, size = 0x4, scoped, tag = 'scoped memory for tpu_custom_call.1']
    #allocation4 [shape = 's32[1]{0}', space=sflag, size = 0x4, scoped, tag = 'scoped memory for tpu_custom_call.1']
    #allocation5 [shape = 'u8[16384]{0}', space=vmem, size = 0x4000, scoped, tag = 'input window, operand 1, single buffered']
    #allocation6 [shape = 's32[1]{0}', space=sflag, size = 0x4, scoped, tag = 'scoped memory for tpu_custom_call.1']
    #allocation7 [shape = 'u8[16384]{0}', space=vmem, size = 0x4000, scoped, tag = 'input window, operand 2, single buffered']
    #allocation8 [shape = 'u8[131072]{0}', space=vmem, size = 0x20000, scoped, tag = 'input window, operand 3, single buffered']
    #allocation9 [shape = 's32[1]{0}', space=sflag, size = 0x4, scoped, tag = 'scoped memory for tpu_custom_call.1']
    #allocation10 [shape = 'u8[131072]{0}', space=vmem, size = 0x20000, scoped, tag = 'input window, operand 4, single buffered']
    #allocation11 [shape = 'u8[4096]{0}', space=vmem, size = 0x1000, scoped, tag = 'output window, operand 0, single buffered']
    #allocation12 [shape = 'u8[4096]{0}', space=vmem, size = 0x1000, scoped, tag = 'output window, operand 1, single buffered']
    #allocation13 [shape = 's32[1]{0}', space=sflag, size = 0x4, scoped, tag = 'scoped memory for tpu_custom_call.1']
    %12 = vsyncpa [#allocation3], 0
    %13 = vsyncpa [#allocation6], 0
    %14 = vsyncpa [#allocation9], 0
    %15 = vsyncpa [#allocation4], 0
    %16 = vsyncpa [#allocation13], 0
    // Predicated region
    $region2: #{tpu_custom_call.1} parent=1 // pred_check
      _
    $region3: #{tpu_custom_call.1} parent=1 // pred_check_branch
      %18 = sbr.rel (0) target = $region5
    $region4: #{tpu_custom_call.1} parent=1 // pred_region
      %s20 = ssub.s32 128, 128
      %21 = vsyncadd [#allocation3], %s20
      %s23 = sshll.u32 [#allocation2], 4
      %s24 = int_to_ptr.vmem [resolvable:$true] %s23
      %26 = dma.hbm_to_vmem [thread:$0]  %s0, 128, %s24, [#allocation3]
    $region5: #{tpu_custom_call.1} parent=1 // pred_fallthru
      _
    // Predicated region
    $region6: #{tpu_custom_call.1} parent=1 // pred_check
      _
    $region7: #{tpu_custom_call.1} parent=1 // pred_check_branch
      %28 = sbr.rel (0) target = $region9
    $region8: #{tpu_custom_call.1} parent=1 // pred_region
      %s30 = ssub.s32 512, 512
      %31 = vsyncadd [#allocation6], %s30
      %s32 = sshll.u32 [#allocation5], 4
      %s33 = int_to_ptr.vmem [resolvable:$true] %s32
      %38 = dma.hbm_to_vmem [thread:$0]  %s1, 512, %s33, [#allocation6], 128, 128, 8
    $region9: #{tpu_custom_call.1} parent=1 // pred_fallthru
      _
    // Predicated region
    $region10: #{tpu_custom_call.1} parent=1 // pred_check
      _
    $region11: #{tpu_custom_call.1} parent=1 // pred_check_branch
      %40 = sbr.rel (0) target = $region13
    $region12: #{tpu_custom_call.1} parent=1 // pred_region
      %s42 = ssub.s32 512, 512
      %43 = vsyncadd [#allocation6], %s42
      %s44 = sshll.u32 [#allocation7], 4
      %s45 = int_to_ptr.vmem [resolvable:$true] %s44
      %50 = dma.hbm_to_vmem [thread:$0]  %s2, 512, %s45, [#allocation6], 128, 128, 8
    $region13: #{tpu_custom_call.1} parent=1 // pred_fallthru
      _
    // Predicated region
    $region14: #{tpu_custom_call.1} parent=1 // pred_check
      _
    $region15: #{tpu_custom_call.1} parent=1 // pred_check_branch
      %52 = sbr.rel (0) target = $region17
    $region16: #{tpu_custom_call.1} parent=1 // pred_region
      %s54 = ssub.s32 4096, 4096
      %55 = vsyncadd [#allocation9], %s54
      %s56 = sshll.u32 [#allocation8], 4
      %s57 = int_to_ptr.vmem [resolvable:$true] %s56
      %62 = dma.hbm_to_vmem [thread:$0]  %s3, 4096, %s57, [#allocation9], 256, 256, 16
    $region17: #{tpu_custom_call.1} parent=1 // pred_fallthru
      _
    // Predicated region
    $region18: #{tpu_custom_call.1} parent=1 // pred_check
      _
    $region19: #{tpu_custom_call.1} parent=1 // pred_check_branch
      %64 = sbr.rel (0) target = $region21
    $region20: #{tpu_custom_call.1} parent=1 // pred_region
      %s66 = ssub.s32 4096, 4096
      %67 = vsyncadd [#allocation9], %s66
      %s68 = sshll.u32 [#allocation10], 4
      %s69 = int_to_ptr.vmem [resolvable:$true] %s68
      %74 = dma.hbm_to_vmem [thread:$0]  %s4, 4096, %s69, [#allocation9], 128, 128, 8
    $region21: #{tpu_custom_call.1} parent=1 // pred_fallthru
      _
    // Predicated region
    $region22: #{tpu_custom_call.1} parent=1 // pred_check
      _
    $region23: #{tpu_custom_call.1} parent=1 // pred_check_branch
      %76 = sbr.rel (0) target = $region25
    $region24: #{tpu_custom_call.1} parent=1 // pred_region
      %77 = dma.done [#allocation3], 128
    $region25: #{tpu_custom_call.1} parent=1 // pred_fallthru
      _
    // Predicated region
    $region26: #{tpu_custom_call.1} parent=1 // pred_check
      _
    $region27: #{tpu_custom_call.1} parent=1 // pred_check_branch
      %79 = sbr.rel (0) target = $region29
    $region28: #{tpu_custom_call.1} parent=1 // pred_region
      %80 = dma.done [#allocation6], 512
    $region29: #{tpu_custom_call.1} parent=1 // pred_fallthru
      _
    // Predicated region
    $region30: #{tpu_custom_call.1} parent=1 // pred_check
      _
    $region31: #{tpu_custom_call.1} parent=1 // pred_check_branch
      %82 = sbr.rel (0) target = $region33
    $region32: #{tpu_custom_call.1} parent=1 // pred_region
      %83 = dma.done [#allocation6], 512
    $region33: #{tpu_custom_call.1} parent=1 // pred_fallthru
      _
    // Predicated region
    $region34: #{tpu_custom_call.1} parent=1 // pred_check
      _
    $region35: #{tpu_custom_call.1} parent=1 // pred_check_branch
      %85 = sbr.rel (0) target = $region37
    $region36: #{tpu_custom_call.1} parent=1 // pred_region
      %86 = dma.done [#allocation9], 4096
    $region37: #{tpu_custom_call.1} parent=1 // pred_fallthru
      _
    // Predicated region
    $region38: #{tpu_custom_call.1} parent=1 // pred_check
      _
    $region39: #{tpu_custom_call.1} parent=1 // pred_check_branch
      %88 = sbr.rel (0) target = $region41
    $region40: #{tpu_custom_call.1} parent=1 // pred_region
      %89 = dma.done [#allocation9], 4096
    $region41: #{tpu_custom_call.1} parent=1 // pred_fallthru
      _
    %v91 = vld [vmem:[#allocation2] sm:$0xff]
    %v92 = vld [vmem:[#allocation5] sm:$0xff]
    %v93 = vld [vmem:[#allocation5 + $0x8] sm:$0xff]
    %v94 = vld [vmem:[#allocation5 + $0x10] sm:$0xff]
    %v95 = vld [vmem:[#allocation5 + $0x18] sm:$0xff]
    %vm96 = vcmask 261120
    %v98 = vsel %vm96, %v91, 0
    %100 = vmatprep.subr.mxu0 0.0
    %101 = vmatpush1.msra.mxu0 %v92
    %102 = vmatprep.subr.mxu0 0.0
    %103 = vmatpush1.msra.mxu0 %v93
    %104 = vmatprep.subr.mxu0 0.0
    %105 = vmatpush1.msra.mxu0 %v94
    %106 = vmatprep.subr.mxu0 0.0
    %107 = vmatpush1.msra.mxu0 %v95
    %108 = vmatprep.subr.mxu0 0.0
    %109 = vmatpush1.msra.mxu0 0.0
    %110 = vmatprep.subr.mxu0 0.0
    %111 = vmatpush1.msra.mxu0 0.0
    %112 = vmatprep.subr.mxu0 0.0
    %113 = vmatpush1.msra.mxu0 0.0
    %114 = vmatprep.subr.mxu0 0.0
    %115 = vmatpush1.msra.mxu0 0.0
    %116 = vmatprep.subr.mxu0 0.0
    %117 = vmatpush1.msra.mxu0 0.0
    %118 = vmatprep.subr.mxu0 0.0
    %119 = vmatpush1.msra.mxu0 0.0
    %120 = vmatprep.subr.mxu0 0.0
    %121 = vmatpush1.msra.mxu0 0.0
    %122 = vmatprep.subr.mxu0 0.0
    %123 = vmatpush1.msra.mxu0 0.0
    %124 = vmatprep.subr.mxu0 0.0
    %125 = vmatpush1.msra.mxu0 0.0
    %126 = vmatprep.subr.mxu0 0.0
    %127 = vmatpush1.msra.mxu0 0.0
    %128 = vmatprep.subr.mxu0 0.0
    %129 = vmatpush1.msra.mxu0 0.0
    %130 = vmatprep.subr.mxu0 0.0
    %131 = vmatpush1.msra.mxu0 0.0
    %132 = vmatprep.subr.mxu0 0.0
    %133 = vmatpush1.msra.mxu0 0.0
    %134 = vmatprep.subr.mxu0 0.0
    %135 = vmatpush1.msra.mxu0 0.0
    %136 = vmatprep.subr.mxu0 0.0
    %137 = vmatpush1.msra.mxu0 0.0
    %138 = vmatprep.subr.mxu0 0.0
    %139 = vmatpush1.msra.mxu0 0.0
    %140 = vmatprep.subr.mxu0 0.0
    %141 = vmatpush1.msra.mxu0 0.0
    %142 = vmatprep.subr.mxu0 0.0
    %143 = vmatpush1.msra.mxu0 0.0
    %144 = vmatprep.subr.mxu0 0.0
    %145 = vmatpush1.msra.mxu0 0.0
    %146 = vmatprep.subr.mxu0 0.0
    %147 = vmatpush1.msra.mxu0 0.0
    %148 = vmatprep.subr.mxu0 0.0
    %149 = vmatpush1.msra.mxu0 0.0
    %150 = vmatprep.subr.mxu0 0.0
    %151 = vmatpush1.msra.mxu0 0.0
    %152 = vmatprep.subr.mxu0 0.0
    %153 = vmatpush1.msra.mxu0 0.0
    %154 = vmatprep.subr.mxu0 0.0
    %155 = vmatpush1.msra.mxu0 0.0
    %156 = vmatprep.subr.mxu0 0.0
    %157 = vmatpush1.msra.mxu0 0.0
    %158 = vmatprep.subr.mxu0 0.0
    %159 = vmatpush1.msra.mxu0 0.0
    %160 = vmatprep.subr.mxu0 0.0
    %161 = vmatpush1.msra.mxu0 0.0
    %162 = vmatprep.subr.mxu0 0.0
    %163 = vmatpush1.msra.mxu0 0.0
    %164 = vmatprep.mubr.f32.mxu0 0.0
    %165 = vmatmul.mubr.f32.gmra.mrb[0].mxu0 %v98
    %v166 = vpop.f32.mrb[0].mxu0
    %v167 = vadd.f32 0.0, %v166
    %v168 = vpop.f32.mrb[0].mxu0
    %169 = vdwg.mxu0
    %v170 = vlaneseq
    %v171 = vand.u32 %v170, 127
    %vm172 = vcmp.lt.s32.totalorder %v171, 8
    %v173 = vsel %vm172, %v167, -1e+30
    %v174 = vpack.c.bf16 %v91, %v91
    %v175 = vld [vmem:[#allocation7] sm:$0xff]
    %v176 = vld [vmem:[#allocation7 + $0x8] sm:$0xff]
    %v177 = vld [vmem:[#allocation7 + $0x10] sm:$0xff]
    %v178 = vld [vmem:[#allocation7 + $0x18] sm:$0xff]
    %v183 = vunpack.c.l.b16 %v175
    %v184 = vunpack.c.h.b16 %v175
    %v185 = vunpack.c.l.b16 %v176
    %v186 = vunpack.c.h.b16 %v176
    %v187 = vunpack.c.l.b16 %v177
    %v188 = vunpack.c.h.b16 %v177
    %v189 = vunpack.c.l.b16 %v178
    %v190 = vunpack.c.h.b16 %v178
    %v191 = vpack.c.b16 %v185, %v183
    %v192 = vpack.c.b16 %v186, %v184
    %v193 = vpack.c.b16 %v189, %v187
    %v194 = vpack.c.b16 %v190, %v188
    %v200 = vsel %vm96, %v174, 0
    %202 = vmatprep.subr.bf16.mxu0 %v192
    %203 = vmatpush1.bf16.msra.mxu0 %v191
    %204 = vmatprep.subr.bf16.mxu0 %v194
    %205 = vmatpush1.bf16.msra.mxu0 %v193
    %206 = vmatprep.subr.bf16.mxu0 0
    %207 = vmatpush1.bf16.msra.mxu0 0
    %208 = vmatprep.subr.bf16.mxu0 0
    %209 = vmatpush1.bf16.msra.mxu0 0
    %210 = vmatprep.subr.bf16.mxu0 0
    %211 = vmatpush1.bf16.msra.mxu0 0
    %212 = vmatprep.subr.bf16.mxu0 0
    %213 = vmatpush1.bf16.msra.mxu0 0
    %214 = vmatprep.subr.bf16.mxu0 0
    %215 = vmatpush1.bf16.msra.mxu0 0
    %216 = vmatprep.subr.bf16.mxu0 0
    %217 = vmatpush1.bf16.msra.mxu0 0
    %218 = vmatprep.subr.bf16.mxu0 0
    %219 = vmatpush1.bf16.msra.mxu0 0
    %220 = vmatprep.subr.bf16.mxu0 0
    %221 = vmatpush1.bf16.msra.mxu0 0
    %222 = vmatprep.subr.bf16.mxu0 0
    %223 = vmatpush1.bf16.msra.mxu0 0
    %224 = vmatprep.subr.bf16.mxu0 0
    %225 = vmatpush1.bf16.msra.mxu0 0
    %226 = vmatprep.subr.bf16.mxu0 0
    %227 = vmatpush1.bf16.msra.mxu0 0
    %228 = vmatprep.subr.bf16.mxu0 0
    %229 = vmatpush1.bf16.msra.mxu0 0
    %230 = vmatprep.subr.bf16.mxu0 0
    %231 = vmatpush1.bf16.msra.mxu0 0
    %232 = vmatprep.subr.bf16.mxu0 0
    %233 = vmatpush1.bf16.msra.mxu0 0
    %234 = vmatprep.mubr.bf16.mxu0 0
    %235 = vmatmul.mubr.bf16.gmra.mrb[0].mxu0 %v200
    %v236 = vpop.f32.mrb[0].mxu0
    %v237 = vadd.f32 0.0, %v236
    %v238 = vpop.f32.mrb[0].mxu0
    %v239 = vadd.f32 0.0, %v238
    %v240 = vpop.f32.mrb[0].mxu0
    %v241 = vpop.f32.mrb[0].mxu0
    %242 = vdwg.mxu0
    %243 = vmax.xlane.f32.xlu0 %v173
    %v244 = vpop.xlane.xlu0 %243
    %vm245 = vcmp.eq.f32.partialorder %v173, %v244
    %v246 = vsel %vm245, %v171, 128
    %v247 = vand.u32 %v246, 65535
    %v248 = vshra.s32 %v246, 16
    %v249 = vcvt.s32.f32 %v247
    %v250 = vcvt.s32.f32 %v248
    %251 = vmin.xlane.f32.xlu0 %v250
    %v252 = vpop.xlane.xlu0 %251
    %vm253 = vcmp.eq.f32.partialorder %v250, %v252
    %v254 = vsel %vm253, %v249, inf
    %255 = vmin.xlane.f32.xlu0 %v254
    %v256 = vpop.xlane.xlu0 %255
    %v257 = vcvt.f32.s32 %v256
    %v258 = vcvt.f32.s32 %v252
    %v259 = vshll.u32 %v258, 16
    %v260 = vadd.s32 %v259, %v257
    %vm261 = vcmp.eq.s32.totalorder %v171, %v260
    %v262 = vsel %vm261, -1e+30, %v173
    %263 = vmax.xlane.f32.xlu0 %v262
    %v264 = vpop.xlane.xlu0 %263
    %vm265 = vcmp.eq.f32.partialorder %v262, %v264
    %v266 = vsel %vm265, %v171, 128
    %v267 = vand.u32 %v266, 65535
    %v268 = vshra.s32 %v266, 16
    %v269 = vcvt.s32.f32 %v267
    %v270 = vcvt.s32.f32 %v268
    %271 = vmin.xlane.f32.xlu0 %v270
    %v272 = vpop.xlane.xlu0 %271
    %vm273 = vcmp.eq.f32.partialorder %v270, %v272
    %v274 = vsel %vm273, %v269, inf
    %275 = vmin.xlane.f32.xlu0 %v274
    %v276 = vpop.xlane.xlu0 %275
    %v277 = vcvt.f32.s32 %v276
    %v278 = vcvt.f32.s32 %v272
    %v279 = vshll.u32 %v278, 16
    %v280 = vadd.s32 %v279, %v277
    %vm281 = vcmp.eq.s32.totalorder %v171, %v280
    %vm282 = vmor %vm261, %vm281
    %v283 = vsel %vm282, %v173, -1e+30
    %284 = vmax.xlane.f32.xlu0 %v283
    %v285 = vpop.xlane.xlu0 %284
    %v286 = vsub.f32 %v283, %v285
    %v287 = vmul.f32 %v286, 1.442695
    %v288 = vpow.pop %v287
    %v289 = vsel %vm282, %v288, 0.0
    %290 = vadd.xlane.f32.xlu0 %v289
    %v291 = vpop.xlane.xlu0 %290
    %v292 = vrcp.pop %v291
    %v293 = vmul.f32 %v289, %v292
    %vm294 = vcmask 64512
    %295 = vst.msk [vmem:[#allocation12] sm:$0xff] %vm294, %v293
    %v296 = vld [vmem:[#allocation8] sm:$0xff]
    %v297 = vld [vmem:[#allocation8 + $0x8] sm:$0xff]
    %v298 = vld [vmem:[#allocation8 + $0x10] sm:$0xff]
    %v299 = vld [vmem:[#allocation8 + $0x18] sm:$0xff]
    %v300 = vld [vmem:[#allocation8 + $0x20] sm:$0xff]
    %v301 = vld [vmem:[#allocation8 + $0x28] sm:$0xff]
    %v302 = vld [vmem:[#allocation8 + $0x30] sm:$0xff]
    %v303 = vld [vmem:[#allocation8 + $0x38] sm:$0xff]
    %v304 = vld [vmem:[#allocation8 + $0x40] sm:$0xff]
    %v305 = vld [vmem:[#allocation8 + $0x48] sm:$0xff]
    %v306 = vld [vmem:[#allocation8 + $0x50] sm:$0xff]
    %v307 = vld [vmem:[#allocation8 + $0x58] sm:$0xff]
    %v308 = vld [vmem:[#allocation8 + $0x60] sm:$0xff]
    %v309 = vld [vmem:[#allocation8 + $0x68] sm:$0xff]
    %v310 = vld [vmem:[#allocation8 + $0x70] sm:$0xff]
    %v311 = vld [vmem:[#allocation8 + $0x78] sm:$0xff]
    %v312 = vld [vmem:[#allocation8 + $0x80] sm:$0xff]
    %v313 = vld [vmem:[#allocation8 + $0x88] sm:$0xff]
    %v314 = vld [vmem:[#allocation8 + $0x90] sm:$0xff]
    %v315 = vld [vmem:[#allocation8 + $0x98] sm:$0xff]
    %v316 = vld [vmem:[#allocation8 + $0xa0] sm:$0xff]
    %v317 = vld [vmem:[#allocation8 + $0xa8] sm:$0xff]
    %v318 = vld [vmem:[#allocation8 + $0xb0] sm:$0xff]
    %v319 = vld [vmem:[#allocation8 + $0xb8] sm:$0xff]
    %v320 = vld [vmem:[#allocation8 + $0xc0] sm:$0xff]
    %v321 = vld [vmem:[#allocation8 + $0xc8] sm:$0xff]
    %v322 = vld [vmem:[#allocation8 + $0xd0] sm:$0xff]
    %v323 = vld [vmem:[#allocation8 + $0xd8] sm:$0xff]
    %v324 = vld [vmem:[#allocation8 + $0xe0] sm:$0xff]
    %v325 = vld [vmem:[#allocation8 + $0xe8] sm:$0xff]
    %v326 = vld [vmem:[#allocation8 + $0xf0] sm:$0xff]
    %v327 = vld [vmem:[#allocation8 + $0xf8] sm:$0xff]
    %328 = vmatprep.subr.mxu0 %v297
    %329 = vmatpush1.msra.mxu0 %v296
    %330 = vmatprep.subr.mxu0 %v299
    %331 = vmatpush1.msra.mxu0 %v298
    %332 = vmatprep.subr.mxu0 %v301
    %333 = vmatpush1.msra.mxu0 %v300
    %334 = vmatprep.subr.mxu0 %v303
    %335 = vmatpush1.msra.mxu0 %v302
    %336 = vmatprep.subr.mxu0 %v305
    %337 = vmatpush1.msra.mxu0 %v304
    %338 = vmatprep.subr.mxu0 %v307
    %339 = vmatpush1.msra.mxu0 %v306
    %340 = vmatprep.subr.mxu0 %v309
    %341 = vmatpush1.msra.mxu0 %v308
    %342 = vmatprep.subr.mxu0 %v311
    %343 = vmatpush1.msra.mxu0 %v310
    %344 = vmatprep.subr.mxu0 %v313
    %345 = vmatpush1.msra.mxu0 %v312
    %346 = vmatprep.subr.mxu0 %v315
    %347 = vmatpush1.msra.mxu0 %v314
    %348 = vmatprep.subr.mxu0 %v317
    %349 = vmatpush1.msra.mxu0 %v316
    %350 = vmatprep.subr.mxu0 %v319
    %351 = vmatpush1.msra.mxu0 %v318
    %352 = vmatprep.subr.mxu0 %v321
    %353 = vmatpush1.msra.mxu0 %v320
    %354 = vmatprep.subr.mxu0 %v323
    %355 = vmatpush1.msra.mxu0 %v322
    %356 = vmatprep.subr.mxu0 %v325
    %357 = vmatpush1.msra.mxu0 %v324
    %358 = vmatprep.subr.mxu0 %v327
    %359 = vmatpush1.msra.mxu0 %v326
    %360 = vmatprep.subr.mxu0 0.0
    %361 = vmatpush1.msra.mxu0 0.0
    %362 = vmatprep.subr.mxu0 0.0
    %363 = vmatpush1.msra.mxu0 0.0
    %364 = vmatprep.subr.mxu0 0.0
    %365 = vmatpush1.msra.mxu0 0.0
    %366 = vmatprep.subr.mxu0 0.0
    %367 = vmatpush1.msra.mxu0 0.0
    %368 = vmatprep.subr.mxu0 0.0
    %369 = vmatpush1.msra.mxu0 0.0
    %370 = vmatprep.subr.mxu0 0.0
    %371 = vmatpush1.msra.mxu0 0.0
    %372 = vmatprep.subr.mxu0 0.0
    %373 = vmatpush1.msra.mxu0 0.0
    %374 = vmatprep.subr.mxu0 0.0
    %375 = vmatpush1.msra.mxu0 0.0
    %376 = vmatprep.subr.mxu0 0.0
    %377 = vmatpush1.msra.mxu0 0.0
    %378 = vmatprep.subr.mxu0 0.0
    %379 = vmatpush1.msra.mxu0 0.0
    %380 = vmatprep.subr.mxu0 0.0
    %381 = vmatpush1.msra.mxu0 0.0
    %382 = vmatprep.subr.mxu0 0.0
    %383 = vmatpush1.msra.mxu0 0.0
    %384 = vmatprep.subr.mxu0 0.0
    %385 = vmatpush1.msra.mxu0 0.0
    %386 = vmatprep.subr.mxu0 0.0
    %387 = vmatpush1.msra.mxu0 0.0
    %388 = vmatprep.subr.mxu0 0.0
    %389 = vmatpush1.msra.mxu0 0.0
    %390 = vmatprep.subr.mxu0 0.0
    %391 = vmatpush1.msra.mxu0 0.0
    %392 = vmatprep.mubr.f32.mxu0 0.0
    %393 = vmatmul.mubr.f32.gmra.mrb[0].mxu0 %v293
    %v394 = vpop.f32.mrb[0].mxu0
    %v395 = vadd.f32 0.0, %v394
    %v396 = vpop.f32.mrb[0].mxu0
    %v397 = vadd.f32 0.0, %v396
    %398 = vdwg.mxu0
    %v399 = vmul.f32 %v237, %v395
    %v400 = vmul.f32 %v239, %v397
    %v401 = vld [vmem:[#allocation10] sm:$0xff]
    %v402 = vld [vmem:[#allocation10 + $0x8] sm:$0xff]
    %v403 = vld [vmem:[#allocation10 + $0x10] sm:$0xff]
    %v404 = vld [vmem:[#allocation10 + $0x18] sm:$0xff]
    %v405 = vld [vmem:[#allocation10 + $0x20] sm:$0xff]
    %v406 = vld [vmem:[#allocation10 + $0x28] sm:$0xff]
    %v407 = vld [vmem:[#allocation10 + $0x30] sm:$0xff]
    %v408 = vld [vmem:[#allocation10 + $0x38] sm:$0xff]
    %v409 = vld [vmem:[#allocation10 + $0x40] sm:$0xff]
    %v410 = vld [vmem:[#allocation10 + $0x48] sm:$0xff]
    %v411 = vld [vmem:[#allocation10 + $0x50] sm:$0xff]
    %v412 = vld [vmem:[#allocation10 + $0x58] sm:$0xff]
    %v413 = vld [vmem:[#allocation10 + $0x60] sm:$0xff]
    %v414 = vld [vmem:[#allocation10 + $0x68] sm:$0xff]
    %v415 = vld [vmem:[#allocation10 + $0x70] sm:$0xff]
    %v416 = vld [vmem:[#allocation10 + $0x78] sm:$0xff]
    %v417 = vld [vmem:[#allocation10 + $0x80] sm:$0xff]
    %v418 = vld [vmem:[#allocation10 + $0x88] sm:$0xff]
    %v419 = vld [vmem:[#allocation10 + $0x90] sm:$0xff]
    %v420 = vld [vmem:[#allocation10 + $0x98] sm:$0xff]
    %v421 = vld [vmem:[#allocation10 + $0xa0] sm:$0xff]
    %v422 = vld [vmem:[#allocation10 + $0xa8] sm:$0xff]
    %v423 = vld [vmem:[#allocation10 + $0xb0] sm:$0xff]
    %v424 = vld [vmem:[#allocation10 + $0xb8] sm:$0xff]
    %v425 = vld [vmem:[#allocation10 + $0xc0] sm:$0xff]
    %v426 = vld [vmem:[#allocation10 + $0xc8] sm:$0xff]
    %v427 = vld [vmem:[#allocation10 + $0xd0] sm:$0xff]
    %v428 = vld [vmem:[#allocation10 + $0xd8] sm:$0xff]
    %v429 = vld [vmem:[#allocation10 + $0xe0] sm:$0xff]
    %v430 = vld [vmem:[#allocation10 + $0xe8] sm:$0xff]
    %v431 = vld [vmem:[#allocation10 + $0xf0] sm:$0xff]
    %v432 = vld [vmem:[#allocation10 + $0xf8] sm:$0xff]
    %433 = vmatprep.subr.mxu0 0.0
    %434 = vmatpush1.msra.mxu0 %v401
    %435 = vmatprep.subr.mxu0 0.0
    %436 = vmatpush1.msra.mxu0 %v402
    %437 = vmatprep.subr.mxu0 0.0
    %438 = vmatpush1.msra.mxu0 %v403
    %439 = vmatprep.subr.mxu0 0.0
    %440 = vmatpush1.msra.mxu0 %v404
    %441 = vmatprep.subr.mxu0 0.0
    %442 = vmatpush1.msra.mxu0 %v405
    %443 = vmatprep.subr.mxu0 0.0
    %444 = vmatpush1.msra.mxu0 %v406
    %445 = vmatprep.subr.mxu0 0.0
    %446 = vmatpush1.msra.mxu0 %v407
    %447 = vmatprep.subr.mxu0 0.0
    %448 = vmatpush1.msra.mxu0 %v408
    %449 = vmatprep.subr.mxu0 0.0
    %450 = vmatpush1.msra.mxu0 %v409
    %451 = vmatprep.subr.mxu0 0.0
    %452 = vmatpush1.msra.mxu0 %v410
    %453 = vmatprep.subr.mxu0 0.0
    %454 = vmatpush1.msra.mxu0 %v411
    %455 = vmatprep.subr.mxu0 0.0
    %456 = vmatpush1.msra.mxu0 %v412
    %457 = vmatprep.subr.mxu0 0.0
    %458 = vmatpush1.msra.mxu0 %v413
    %459 = vmatprep.subr.mxu0 0.0
    %460 = vmatpush1.msra.mxu0 %v414
    %461 = vmatprep.subr.mxu0 0.0
    %462 = vmatpush1.msra.mxu0 %v415
    %463 = vmatprep.subr.mxu0 0.0
    %464 = vmatpush1.msra.mxu0 %v416
    %465 = vmatprep.subr.mxu0 0.0
    %466 = vmatpush1.msra.mxu0 %v417
    %467 = vmatprep.subr.mxu0 0.0
    %468 = vmatpush1.msra.mxu0 %v418
    %469 = vmatprep.subr.mxu0 0.0
    %470 = vmatpush1.msra.mxu0 %v419
    %471 = vmatprep.subr.mxu0 0.0
    %472 = vmatpush1.msra.mxu0 %v420
    %473 = vmatprep.subr.mxu0 0.0
    %474 = vmatpush1.msra.mxu0 %v421
    %475 = vmatprep.subr.mxu0 0.0
    %476 = vmatpush1.msra.mxu0 %v422
    %477 = vmatprep.subr.mxu0 0.0
    %478 = vmatpush1.msra.mxu0 %v423
    %479 = vmatprep.subr.mxu0 0.0
    %480 = vmatpush1.msra.mxu0 %v424
    %481 = vmatprep.subr.mxu0 0.0
    %482 = vmatpush1.msra.mxu0 %v425
    %483 = vmatprep.subr.mxu0 0.0
    %484 = vmatpush1.msra.mxu0 %v426
    %485 = vmatprep.subr.mxu0 0.0
    %486 = vmatpush1.msra.mxu0 %v427
    %487 = vmatprep.subr.mxu0 0.0
    %488 = vmatpush1.msra.mxu0 %v428
    %489 = vmatprep.subr.mxu0 0.0
    %490 = vmatpush1.msra.mxu0 %v429
    %491 = vmatprep.subr.mxu0 0.0
    %492 = vmatpush1.msra.mxu0 %v430
    %493 = vmatprep.subr.mxu0 0.0
    %494 = vmatpush1.msra.mxu0 %v431
    %495 = vmatprep.subr.mxu0 0.0
    %496 = vmatpush1.msra.mxu0 %v432
    %497 = vmatprep.mubr.f32.mxu0 %v400
    %498 = vmatmul.mubr.f32.gmra.mrb[0].mxu0 %v399
    %v499 = vpop.f32.mrb[0].mxu0
    %v500 = vadd.f32 0.0, %v499
    %v501 = vpop.f32.mrb[0].mxu0
    %502 = vdwg.mxu0
    %503 = vst [vmem:[#allocation11] sm:$0xff] %v500
    // Predicated region
    $region42: #{tpu_custom_call.1} parent=1 // pred_check
      _
    $region43: #{tpu_custom_call.1} parent=1 // pred_check_branch
      %505 = sbr.rel (0) target = $region45
    $region44: #{tpu_custom_call.1} parent=1 // pred_region
      %s507 = ssub.s32 128, 128
      %508 = vsyncadd [#allocation4], %s507
      %s510 = sshll.u32 [#allocation11], 4
      %s511 = int_to_ptr.vmem [resolvable:$true] %s510
      %513 = dma.vmem_to_hbm [thread:$0]  %s511, 128, %s5, [#allocation4]
    $region45: #{tpu_custom_call.1} parent=1 // pred_fallthru
      _
    // Predicated region
    $region46: #{tpu_custom_call.1} parent=1 // pred_check
      _
    $region47: #{tpu_custom_call.1} parent=1 // pred_check_branch
      %515 = sbr.rel (0) target = $region49
    $region48: #{tpu_custom_call.1} parent=1 // pred_region
      %s517 = ssub.s32 128, 128
      %518 = vsyncadd [#allocation13], %s517
      %s520 = sshll.u32 [#allocation12], 4
      %s521 = int_to_ptr.vmem [resolvable:$true] %s520
      %523 = dma.vmem_to_hbm [thread:$0]  %s521, 128, %s6, [#allocation13]
    $region49: #{tpu_custom_call.1} parent=1 // pred_fallthru
      _
    // Predicated region
    $region50: #{tpu_custom_call.1} parent=1 // pred_check
      _
    $region51: #{tpu_custom_call.1} parent=1 // pred_check_branch
      %525 = sbr.rel (0) target = $region53
    $region52: #{tpu_custom_call.1} parent=1 // pred_region
      %526 = dma.done [#allocation4], 128
    $region53: #{tpu_custom_call.1} parent=1 // pred_fallthru
      _
    // Predicated region
    $region54: #{tpu_custom_call.1} parent=1 // pred_check
      _
    $region55: #{tpu_custom_call.1} parent=1 // pred_check_branch
      %528 = sbr.rel (0) target = $region57
    $region56: #{tpu_custom_call.1} parent=1 // pred_region
      %529 = dma.done [#allocation13], 128
    $region57: #{tpu_custom_call.1} parent=1 // pred_fallthru
      _
    %530 = vsyncpa [#allocation3], 1
    %531 = vsyncpa [#allocation6], 1
    %532 = vsyncpa [#allocation9], 1
    %533 = vsyncpa [#allocation4], 1
    %534 = vsyncpa [#allocation13], 1

</llo_original>
